<compile_context>
chip_gen: v7x
topology: tpu7x:2x2x1
jax: 0.10.0
libtpu: 0.0.40
codegen_flags: <defaults>
</compile_context>

<pallas_src>
import functools

import jax
import jax.numpy as jnp
from jax.experimental import pallas as pl
from jax.experimental.pallas import tpu as pltpu


def _bilstm_sum_kernel(x_ref, lens_ref, wih_ref, whh_ref, b_ref, out_ref, gx_sc):
    """One grid step == one LSTM direction over the full (resident) sequence.

    x_ref   : (T*N, D)    time-major input, rows t*N .. t*N+N-1 are timestep t
    lens_ref: (N, 1)      int32 valid lengths (0 for padded batch rows)
    wih_ref : (1, D, 4H)  W_ih^T for this direction, gate order [i, f, o, g]
    whh_ref : (1, H, 4H)  W_hh^T for this direction
    b_ref   : (1, 1, 4H)  b_ih + b_hh for this direction
    out_ref : (1, N, H)   sum over valid timesteps of hidden states
    gx_sc   : (T*N, 4H)   VMEM scratch for the hoisted input projection
    """
    d = pl.program_id(0)                     # 0 = forward, 1 = backward
    TN, _ = x_ref.shape
    N = out_ref.shape[1]
    H = out_ref.shape[2]
    T = TN // N

    # ---- hoisted input projection: one big MXU matmul + bias, outside the loop ----
    gx_sc[...] = (jnp.dot(x_ref[...], wih_ref[0],
                          preferred_element_type=jnp.float32) + b_ref[0])

    whh = whh_ref[0]                         # (H, 4H)
    lens = lens_ref[...]                     # (N, 1) int32

    def step(s, carry):
        h, c, acc = carry
        # Forward walks t = 0..T-1; backward walks t = T-1..0.  Masking on the real
        # time index reproduces packed-sequence semantics exactly: h/c stay zero
        # while masked, so the backward pass starts its recurrence at t = len-1.
        t = jnp.where(d == 0, s, T - 1 - s)
        row0 = pl.multiple_of(t * N, N)
        gates = gx_sc[pl.ds(row0, N), :] + jnp.dot(
            h, whh, preferred_element_type=jnp.float32)        # (N, 4H)

        # Gate order [i, f, o | g]: one sigmoid over 3H lanes, one tanh over H lanes.
        sig = jax.nn.sigmoid(gates[:, :3 * H])
        i_g = sig[:, :H]
        f_g = sig[:, H:2 * H]
        o_g = sig[:, 2 * H:3 * H]
        g_g = jnp.tanh(gates[:, 3 * H:])

        c_new = f_g * c + i_g * g_g
        h_new = o_g * jnp.tanh(c_new)

        mask = t < lens                                         # (N, 1) bool
        h = jnp.where(mask, h_new, h)
        c = jnp.where(mask, c_new, c)
        acc = acc + jnp.where(mask, h_new, 0.0)
        return h, c, acc

    z = jnp.zeros((N, H), jnp.float32)
    _, _, acc = jax.lax.fori_loop(0, T, step, (z, z, z), unroll=True)
    out_ref[0] = acc


def article_encoder_forward(articles, article_lens, params):
    """articles: (N, T, D) f32, article_lens: (N,) int32 sorted descending.
    Returns (N, 2H) f32 == torch.sum(pad_packed(BiLSTM(pack(articles))), dim=1)."""
    N, T, D = articles.shape
    H = params["whh_f"].shape[1]
    H4 = 4 * H

    # ---- pad batch rows to a full f32 sublane group (multiple of 8) ----
    N_pad = ((N + 7) // 8) * 8
    pad_rows = N_pad - N

    x = jnp.transpose(articles.astype(jnp.float32), (1, 0, 2))      # (T, N, D)
    if pad_rows:
        x = jnp.pad(x, ((0, 0), (0, pad_rows), (0, 0)))
    x2d = x.reshape(T * N_pad, D)                                    # time-major rows

    lens = article_lens.astype(jnp.int32)
    if pad_rows:
        lens = jnp.concatenate([lens, jnp.zeros((pad_rows,), jnp.int32)])
    lens2d = lens.reshape(N_pad, 1)

    # ---- weight prep: reorder gates [i,f,g,o] -> [i,f,o,g], pre-transpose ----
    def _reorder(m):
        return jnp.concatenate([m[:H], m[H:2 * H], m[3 * H:], m[2 * H:3 * H]], axis=0)

    def _prep(wih, whh, bih, bhh):
        return (_reorder(wih).T,                      # (D, 4H)
                _reorder(whh).T,                      # (H, 4H)
                _reorder(bih + bhh).reshape(1, H4))   # (1, 4H)

    wih_f, whh_f, b_f = _prep(params["wih_f"], params["whh_f"],
                              params["bih_f"], params["bhh_f"])
    wih_b, whh_b, b_b = _prep(params["wih_b"], params["whh_b"],
                              params["bih_b"], params["bhh_b"])

    wih = jnp.stack([wih_f, wih_b])        # (2, D, 4H)
    whh = jnp.stack([whh_f, whh_b])        # (2, H, 4H)
    bias = jnp.stack([b_f, b_b])           # (2, 1, 4H)

    out = pl.pallas_call(
        _bilstm_sum_kernel,
        out_shape=jax.ShapeDtypeStruct((2, N_pad, H), jnp.float32),
        grid_spec=pltpu.PrefetchScalarGridSpec(
            num_scalar_prefetch=0,
            grid=(2,),                                          # direction only
            in_specs=[
                pl.BlockSpec((T * N_pad, D), lambda d: (0, 0)),  # x (resident)
                pl.BlockSpec((N_pad, 1), lambda d: (0, 0)),      # lengths
                pl.BlockSpec((1, D, H4), lambda d: (d, 0, 0)),   # W_ih^T per dir
                pl.BlockSpec((1, H, H4), lambda d: (d, 0, 0)),   # W_hh^T per dir
                pl.BlockSpec((1, 1, H4), lambda d: (d, 0, 0)),   # bias per dir
            ],
            out_specs=pl.BlockSpec((1, N_pad, H), lambda d: (d, 0, 0)),
            scratch_shapes=[pltpu.VMEM((T * N_pad, H4), jnp.float32)],
        ),
        compiler_params=pltpu.CompilerParams(
            dimension_semantics=("parallel",)),   # 2 TCs on v7x run one dir each
    )(x2d, lens2d, wih, whh, bias)

    # PyTorch bidirectional output = [h_fwd ; h_bwd] along the feature dim.
    return jnp.concatenate([out[0, :N], out[1, :N]], axis=-1)       # (N, 2H)


# ----------------------- pure-JAX reference (for checking) -----------------------
def _ref_dir_sum(x, lens, wih, whh, bih, bhh):
    N, T, D = x.shape
    H = whh.shape[1]
    h = jnp.zeros((N, H), jnp.float32)
    c = jnp.zeros((N, H), jnp.float32)
    acc = jnp.zeros((N, H), jnp.float32)

    def step(carry, inp):
        h, c, acc = carry
        xt, t = inp
        gates = (jnp.dot(xt, wih.T, precision="highest")
                 + jnp.dot(h, whh.T, precision="highest") + bih + bhh)
        i = jax.nn.sigmoid(gates[:, :H])
        f = jax.nn.sigmoid(gates[:, H:2 * H])
        g = jnp.tanh(gates[:, 2 * H:3 * H])
        o = jax.nn.sigmoid(gates[:, 3 * H:])
        cn = f * c + i * g
        hn = o * jnp.tanh(cn)
        m = (t < lens)[:, None].astype(jnp.float32)
        return (m * hn + (1 - m) * h, m * cn + (1 - m) * c, acc + m * hn), None

    (_, _, acc), _ = jax.lax.scan(
        step, (h, c, acc), (jnp.transpose(x, (1, 0, 2)), jnp.arange(T)))
    return acc


def _ref_forward(articles, lens, p):
    N, T, D = articles.shape
    sf = _ref_dir_sum(articles, lens, p["wih_f"], p["whh_f"], p["bih_f"], p["bhh_f"])
    rev_idx = jnp.clip(lens[:, None] - 1 - jnp.arange(T)[None, :], 0, T - 1)
    x_rev = jnp.take_along_axis(articles, rev_idx[:, :, None], axis=1)
    sb = _ref_dir_sum(x_rev, lens, p["wih_b"], p["whh_b"], p["bih_b"], p["bhh_b"])
    return jnp.concatenate([sf, sb], axis=-1)


# ----------------------------------- main -----------------------------------
if __name__ == "__main__":
    # Small shapes consistent with the module:
    #   article_num N=4, max_article_len T=8, d_model D=32, hidden_size H=32
    N, T, D, H = 4, 8, 32, 32

    key = jax.random.PRNGKey(0)
    k_x, k_w = jax.random.split(key)

    articles = jax.random.normal(k_x, (N, T, D), dtype=jnp.float32)
    # pack_padded_sequence default (enforce_sorted=True) requires descending lengths.
    article_lens = jnp.array([8, 6, 5, 3], dtype=jnp.int32)

    # Deterministic parameter init, PyTorch-LSTM style U(-1/sqrt(H), 1/sqrt(H)).
    bound = 1.0 / (H ** 0.5)
    shapes = {
        "wih_f": (4 * H, D), "whh_f": (4 * H, H), "bih_f": (4 * H,), "bhh_f": (4 * H,),
        "wih_b": (4 * H, D), "whh_b": (4 * H, H), "bih_b": (4 * H,), "bhh_b": (4 * H,),
    }
    keys = jax.random.split(k_w, len(shapes))
    params = {name: jax.random.uniform(kk, shp, jnp.float32, -bound, bound)
              for kk, (name, shp) in zip(keys, shapes.items())}

    fwd = jax.jit(functools.partial(article_encoder_forward, params=params))
    out = fwd(articles, article_lens)
    out = jax.block_until_ready(out)
    assert out.shape == (N, 2 * H), out.shape

    ref = _ref_forward(articles, article_lens, params)
    assert jnp.allclose(out, ref, rtol=1e-2, atol=1e-3), float(
        jnp.max(jnp.abs(out - ref)))

    print("KERNEL_OK")
</pallas_src>

<mosaic_0001>
module attributes {stable_mosaic.version = 11 : i64} {
  func.func @_bilstm_sum_kernel(%arg0: i32, %arg1: memref<64x32xf32, #tpu.memory_space<vmem>>, %arg2: memref<8x1xi32, #tpu.memory_space<vmem>>, %arg3: memref<1x32x128xf32, #tpu.memory_space<vmem>>, %arg4: memref<1x32x128xf32, #tpu.memory_space<vmem>>, %arg5: memref<1x1x128xf32, #tpu.memory_space<vmem>>, %arg6: memref<1x8x32xf32, #tpu.memory_space<vmem>>, %arg7: memref<64x128xf32, #tpu.memory_space<vmem>>) attributes {dimension_semantics = [#tpu.dimension_semantics<parallel>], iteration_bounds = array<i64: 2>, scalar_prefetch = 0 : i64, scratch_operands = 1 : i64, tpu.core_type = #tpu.core_type<tc>, window_params = [{pipeline_mode = #tpu.pipeline_mode<synchronous>, transform_indices = @transform_0, window_bounds = array<i64: 64, 32>}, {pipeline_mode = #tpu.pipeline_mode<synchronous>, transform_indices = @transform_1, window_bounds = array<i64: 8, 1>}, {transform_indices = @transform_2, window_bounds = array<i64: 1, 32, 128>}, {transform_indices = @transform_3, window_bounds = array<i64: 1, 32, 128>}, {transform_indices = @transform_4, window_bounds = array<i64: 1, 1, 128>}, {transform_indices = @transform_5, window_bounds = array<i64: 1, 8, 32>}]} {
    %c0 = arith.constant 0 : index
    %c0_0 = arith.constant 0 : index
    %0 = vector.load %arg1[%c0, %c0_0] : memref<64x32xf32, #tpu.memory_space<vmem>>, vector<64x32xf32>
    %c0_1 = arith.constant 0 : index
    %c0_2 = arith.constant 0 : index
    %c0_3 = arith.constant 0 : index
    %1 = vector.load %arg3[%c0_1, %c0_2, %c0_3] : memref<1x32x128xf32, #tpu.memory_space<vmem>>, vector<1x32x128xf32>
    %2 = vector.shape_cast %1 : vector<1x32x128xf32> to vector<32x128xf32>
    %cst = arith.constant dense<0.000000e+00> : vector<64x128xf32>
    %3 = tpu.matmul %0, %2, %cst {dimension_numbers = #tpu.dot_dimension_numbers<[1], [0], [0], [1], [0, 0, 1, 1], [], []>} : vector<64x32xf32>, vector<32x128xf32>, vector<64x128xf32> -> vector<64x128xf32>
    %c0_4 = arith.constant 0 : index
    %c0_5 = arith.constant 0 : index
    %c0_6 = arith.constant 0 : index
    %4 = vector.load %arg5[%c0_4, %c0_5, %c0_6] : memref<1x1x128xf32, #tpu.memory_space<vmem>>, vector<1x1x128xf32>
    %5 = vector.shape_cast %4 : vector<1x1x128xf32> to vector<1x128xf32>
    %6 = vector.broadcast %5 : vector<1x128xf32> to vector<64x128xf32>
    %7 = arith.addf %3, %6 : vector<64x128xf32>
    %c0_7 = arith.constant 0 : index
    %c0_8 = arith.constant 0 : index
    %8 = vector.load %arg7[%c0_7, %c0_8] : memref<64x128xf32, #tpu.memory_space<vmem>>, vector<64x128xf32>
    tpu.vector_store %arg7[%c0_7, %c0_8], %7 {strides = array<i32>} : memref<64x128xf32, #tpu.memory_space<vmem>>, vector<64x128xf32>,
    %c0_9 = arith.constant 0 : index
    %c0_10 = arith.constant 0 : index
    %c0_11 = arith.constant 0 : index
    %9 = vector.load %arg4[%c0_9, %c0_10, %c0_11] : memref<1x32x128xf32, #tpu.memory_space<vmem>>, vector<1x32x128xf32>
    %10 = vector.shape_cast %9 : vector<1x32x128xf32> to vector<32x128xf32>
    %c0_12 = arith.constant 0 : index
    %c0_13 = arith.constant 0 : index
    %11 = vector.load %arg2[%c0_12, %c0_13] : memref<8x1xi32, #tpu.memory_space<vmem>>, vector<8x1xi32>
    %cst_14 = arith.constant 0.000000e+00 : f32
    %12 = vector.broadcast %cst_14 : f32 to vector<8x32xf32>
    %c0_i32 = arith.constant 0 : i32
    %c0_i32_15 = arith.constant 0 : i32
    %13 = arith.cmpi eq, %arg0, %c0_i32_15 : i32
    %c7_i32 = arith.constant 7 : i32
    %14 = arith.subi %c7_i32, %c0_i32 : i32
    %15 = arith.select %13, %c0_i32, %14 : i32
    %c8_i32 = arith.constant 8 : i32
    %16 = arith.muli %15, %c8_i32 : i32
    %17 = tpu.assume_multiple %16, 8 : i32
    %18 = arith.index_cast %17 : i32 to index
    %c0_16 = arith.constant 0 : index
    %19 = vector.load %arg7[%18, %c0_16] : memref<64x128xf32, #tpu.memory_space<vmem>>, vector<8x128xf32>
    %cst_17 = arith.constant dense<0.000000e+00> : vector<8x128xf32>
    %20 = tpu.matmul %12, %10, %cst_17 {dimension_numbers = #tpu.dot_dimension_numbers<[1], [0], [0], [1], [0, 0, 1, 1], [], []>} : vector<8x32xf32>, vector<32x128xf32>, vector<8x128xf32> -> vector<8x128xf32>
    %21 = arith.addf %19, %20 : vector<8x128xf32>
    %22 = vector.extract_strided_slice %21 {offsets = [0, 0], sizes = [8, 96], strides = [1, 1]} : vector<8x128xf32> to vector<8x96xf32>
    %23 = arith.negf %22 : vector<8x96xf32>
    %24 = math.exp %23 : vector<8x96xf32>
    %cst_18 = arith.constant 1.000000e+00 : f32
    %25 = vector.broadcast %cst_18 : f32 to vector<8x96xf32>
    %26 = arith.addf %25, %24 : vector<8x96xf32>
    %27 = arith.divf %25, %26 : vector<8x96xf32>
    %28 = vector.extract_strided_slice %27 {offsets = [0, 0], sizes = [8, 32], strides = [1, 1]} : vector<8x96xf32> to vector<8x32xf32>
    %29 = vector.extract_strided_slice %27 {offsets = [0, 32], sizes = [8, 32], strides = [1, 1]} : vector<8x96xf32> to vector<8x32xf32>
    %30 = vector.extract_strided_slice %27 {offsets = [0, 64], sizes = [8, 32], strides = [1, 1]} : vector<8x96xf32> to vector<8x32xf32>
    %31 = vector.extract_strided_slice %21 {offsets = [0, 96], sizes = [8, 32], strides = [1, 1]} : vector<8x128xf32> to vector<8x32xf32>
    %32 = math.tanh %31 : vector<8x32xf32>
    %33 = arith.mulf %29, %12 : vector<8x32xf32>
    %34 = arith.mulf %28, %32 : vector<8x32xf32>
    %35 = arith.addf %33, %34 : vector<8x32xf32>
    %36 = math.tanh %35 : vector<8x32xf32>
    %37 = arith.mulf %30, %36 : vector<8x32xf32>
    %38 = vector.broadcast %15 : i32 to vector<8x1xi32>
    %39 = arith.cmpi slt, %38, %11 : vector<8x1xi32>
    %40 = vector.shape_cast %39 : vector<8x1xi1> to vector<8x1xi1>
    %41 = vector.broadcast %40 : vector<8x1xi1> to vector<8x32xi1>
    %42 = arith.select %41, %37, %12 : vector<8x32xi1>, vector<8x32xf32>
    %43 = vector.shape_cast %39 : vector<8x1xi1> to vector<8x1xi1>
    %44 = vector.broadcast %43 : vector<8x1xi1> to vector<8x32xi1>
    %45 = arith.select %44, %35, %12 : vector<8x32xi1>, vector<8x32xf32>
    %cst_19 = arith.constant 0.000000e+00 : f32
    %46 = vector.shape_cast %39 : vector<8x1xi1> to vector<8x1xi1>
    %47 = vector.broadcast %46 : vector<8x1xi1> to vector<8x32xi1>
    %48 = vector.broadcast %cst_19 : f32 to vector<8x32xf32>
    %49 = arith.select %47, %37, %48 : vector<8x32xi1>, vector<8x32xf32>
    %50 = arith.addf %12, %49 : vector<8x32xf32>
    %c1_i32 = arith.constant 1 : i32
    %c0_i32_20 = arith.constant 0 : i32
    %51 = arith.cmpi eq, %arg0, %c0_i32_20 : i32
    %c7_i32_21 = arith.constant 7 : i32
    %52 = arith.subi %c7_i32_21, %c1_i32 : i32
    %53 = arith.select %51, %c1_i32, %52 : i32
    %c8_i32_22 = arith.constant 8 : i32
    %54 = arith.muli %53, %c8_i32_22 : i32
    %55 = tpu.assume_multiple %54, 8 : i32
    %56 = arith.index_cast %55 : i32 to index
    %c0_23 = arith.constant 0 : index
    %57 = vector.load %arg7[%56, %c0_23] : memref<64x128xf32, #tpu.memory_space<vmem>>, vector<8x128xf32>
    %cst_24 = arith.constant dense<0.000000e+00> : vector<8x128xf32>
    %58 = tpu.matmul %42, %10, %cst_24 {dimension_numbers = #tpu.dot_dimension_numbers<[1], [0], [0], [1], [0, 0, 1, 1], [], []>} : vector<8x32xf32>, vector<32x128xf32>, vector<8x128xf32> -> vector<8x128xf32>
    %59 = arith.addf %57, %58 : vector<8x128xf32>
    %60 = vector.extract_strided_slice %59 {offsets = [0, 0], sizes = [8, 96], strides = [1, 1]} : vector<8x128xf32> to vector<8x96xf32>
    %61 = arith.negf %60 : vector<8x96xf32>
    %62 = math.exp %61 : vector<8x96xf32>
    %cst_25 = arith.constant 1.000000e+00 : f32
    %63 = vector.broadcast %cst_25 : f32 to vector<8x96xf32>
    %64 = arith.addf %63, %62 : vector<8x96xf32>
    %65 = arith.divf %63, %64 : vector<8x96xf32>
    %66 = vector.extract_strided_slice %65 {offsets = [0, 0], sizes = [8, 32], strides = [1, 1]} : vector<8x96xf32> to vector<8x32xf32>
    %67 = vector.extract_strided_slice %65 {offsets = [0, 32], sizes = [8, 32], strides = [1, 1]} : vector<8x96xf32> to vector<8x32xf32>
    %68 = vector.extract_strided_slice %65 {offsets = [0, 64], sizes = [8, 32], strides = [1, 1]} : vector<8x96xf32> to vector<8x32xf32>
    %69 = vector.extract_strided_slice %59 {offsets = [0, 96], sizes = [8, 32], strides = [1, 1]} : vector<8x128xf32> to vector<8x32xf32>
    %70 = math.tanh %69 : vector<8x32xf32>
    %71 = arith.mulf %67, %45 : vector<8x32xf32>
    %72 = arith.mulf %66, %70 : vector<8x32xf32>
    %73 = arith.addf %71, %72 : vector<8x32xf32>
    %74 = math.tanh %73 : vector<8x32xf32>
    %75 = arith.mulf %68, %74 : vector<8x32xf32>
    %76 = vector.broadcast %53 : i32 to vector<8x1xi32>
    %77 = arith.cmpi slt, %76, %11 : vector<8x1xi32>
    %78 = vector.shape_cast %77 : vector<8x1xi1> to vector<8x1xi1>
    %79 = vector.broadcast %78 : vector<8x1xi1> to vector<8x32xi1>
    %80 = arith.select %79, %75, %42 : vector<8x32xi1>, vector<8x32xf32>
    %81 = vector.shape_cast %77 : vector<8x1xi1> to vector<8x1xi1>
    %82 = vector.broadcast %81 : vector<8x1xi1> to vector<8x32xi1>
    %83 = arith.select %82, %73, %45 : vector<8x32xi1>, vector<8x32xf32>
    %cst_26 = arith.constant 0.000000e+00 : f32
    %84 = vector.shape_cast %77 : vector<8x1xi1> to vector<8x1xi1>
    %85 = vector.broadcast %84 : vector<8x1xi1> to vector<8x32xi1>
    %86 = vector.broadcast %cst_26 : f32 to vector<8x32xf32>
    %87 = arith.select %85, %75, %86 : vector<8x32xi1>, vector<8x32xf32>
    %88 = arith.addf %50, %87 : vector<8x32xf32>
    %c2_i32 = arith.constant 2 : i32
    %c0_i32_27 = arith.constant 0 : i32
    %89 = arith.cmpi eq, %arg0, %c0_i32_27 : i32
    %c7_i32_28 = arith.constant 7 : i32
    %90 = arith.subi %c7_i32_28, %c2_i32 : i32
    %91 = arith.select %89, %c2_i32, %90 : i32
    %c8_i32_29 = arith.constant 8 : i32
    %92 = arith.muli %91, %c8_i32_29 : i32
    %93 = tpu.assume_multiple %92, 8 : i32
    %94 = arith.index_cast %93 : i32 to index
    %c0_30 = arith.constant 0 : index
    %95 = vector.load %arg7[%94, %c0_30] : memref<64x128xf32, #tpu.memory_space<vmem>>, vector<8x128xf32>
    %cst_31 = arith.constant dense<0.000000e+00> : vector<8x128xf32>
    %96 = tpu.matmul %80, %10, %cst_31 {dimension_numbers = #tpu.dot_dimension_numbers<[1], [0], [0], [1], [0, 0, 1, 1], [], []>} : vector<8x32xf32>, vector<32x128xf32>, vector<8x128xf32> -> vector<8x128xf32>
    %97 = arith.addf %95, %96 : vector<8x128xf32>
    %98 = vector.extract_strided_slice %97 {offsets = [0, 0], sizes = [8, 96], strides = [1, 1]} : vector<8x128xf32> to vector<8x96xf32>
    %99 = arith.negf %98 : vector<8x96xf32>
    %100 = math.exp %99 : vector<8x96xf32>
    %cst_32 = arith.constant 1.000000e+00 : f32
    %101 = vector.broadcast %cst_32 : f32 to vector<8x96xf32>
    %102 = arith.addf %101, %100 : vector<8x96xf32>
    %103 = arith.divf %101, %102 : vector<8x96xf32>
    %104 = vector.extract_strided_slice %103 {offsets = [0, 0], sizes = [8, 32], strides = [1, 1]} : vector<8x96xf32> to vector<8x32xf32>
    %105 = vector.extract_strided_slice %103 {offsets = [0, 32], sizes = [8, 32], strides = [1, 1]} : vector<8x96xf32> to vector<8x32xf32>
    %106 = vector.extract_strided_slice %103 {offsets = [0, 64], sizes = [8, 32], strides = [1, 1]} : vector<8x96xf32> to vector<8x32xf32>
    %107 = vector.extract_strided_slice %97 {offsets = [0, 96], sizes = [8, 32], strides = [1, 1]} : vector<8x128xf32> to vector<8x32xf32>
    %108 = math.tanh %107 : vector<8x32xf32>
    %109 = arith.mulf %105, %83 : vector<8x32xf32>
    %110 = arith.mulf %104, %108 : vector<8x32xf32>
    %111 = arith.addf %109, %110 : vector<8x32xf32>
    %112 = math.tanh %111 : vector<8x32xf32>
    %113 = arith.mulf %106, %112 : vector<8x32xf32>
    %114 = vector.broadcast %91 : i32 to vector<8x1xi32>
    %115 = arith.cmpi slt, %114, %11 : vector<8x1xi32>
    %116 = vector.shape_cast %115 : vector<8x1xi1> to vector<8x1xi1>
    %117 = vector.broadcast %116 : vector<8x1xi1> to vector<8x32xi1>
    %118 = arith.select %117, %113, %80 : vector<8x32xi1>, vector<8x32xf32>
    %119 = vector.shape_cast %115 : vector<8x1xi1> to vector<8x1xi1>
    %120 = vector.broadcast %119 : vector<8x1xi1> to vector<8x32xi1>
    %121 = arith.select %120, %111, %83 : vector<8x32xi1>, vector<8x32xf32>
    %cst_33 = arith.constant 0.000000e+00 : f32
    %122 = vector.shape_cast %115 : vector<8x1xi1> to vector<8x1xi1>
    %123 = vector.broadcast %122 : vector<8x1xi1> to vector<8x32xi1>
    %124 = vector.broadcast %cst_33 : f32 to vector<8x32xf32>
    %125 = arith.select %123, %113, %124 : vector<8x32xi1>, vector<8x32xf32>
    %126 = arith.addf %88, %125 : vector<8x32xf32>
    %c3_i32 = arith.constant 3 : i32
    %c0_i32_34 = arith.constant 0 : i32
    %127 = arith.cmpi eq, %arg0, %c0_i32_34 : i32
    %c7_i32_35 = arith.constant 7 : i32
    %128 = arith.subi %c7_i32_35, %c3_i32 : i32
    %129 = arith.select %127, %c3_i32, %128 : i32
    %c8_i32_36 = arith.constant 8 : i32
    %130 = arith.muli %129, %c8_i32_36 : i32
    %131 = tpu.assume_multiple %130, 8 : i32
    %132 = arith.index_cast %131 : i32 to index
    %c0_37 = arith.constant 0 : index
    %133 = vector.load %arg7[%132, %c0_37] : memref<64x128xf32, #tpu.memory_space<vmem>>, vector<8x128xf32>
    %cst_38 = arith.constant dense<0.000000e+00> : vector<8x128xf32>
    %134 = tpu.matmul %118, %10, %cst_38 {dimension_numbers = #tpu.dot_dimension_numbers<[1], [0], [0], [1], [0, 0, 1, 1], [], []>} : vector<8x32xf32>, vector<32x128xf32>, vector<8x128xf32> -> vector<8x128xf32>
    %135 = arith.addf %133, %134 : vector<8x128xf32>
    %136 = vector.extract_strided_slice %135 {offsets = [0, 0], sizes = [8, 96], strides = [1, 1]} : vector<8x128xf32> to vector<8x96xf32>
    %137 = arith.negf %136 : vector<8x96xf32>
    %138 = math.exp %137 : vector<8x96xf32>
    %cst_39 = arith.constant 1.000000e+00 : f32
    %139 = vector.broadcast %cst_39 : f32 to vector<8x96xf32>
    %140 = arith.addf %139, %138 : vector<8x96xf32>
    %141 = arith.divf %139, %140 : vector<8x96xf32>
    %142 = vector.extract_strided_slice %141 {offsets = [0, 0], sizes = [8, 32], strides = [1, 1]} : vector<8x96xf32> to vector<8x32xf32>
    %143 = vector.extract_strided_slice %141 {offsets = [0, 32], sizes = [8, 32], strides = [1, 1]} : vector<8x96xf32> to vector<8x32xf32>
    %144 = vector.extract_strided_slice %141 {offsets = [0, 64], sizes = [8, 32], strides = [1, 1]} : vector<8x96xf32> to vector<8x32xf32>
    %145 = vector.extract_strided_slice %135 {offsets = [0, 96], sizes = [8, 32], strides = [1, 1]} : vector<8x128xf32> to vector<8x32xf32>
    %146 = math.tanh %145 : vector<8x32xf32>
    %147 = arith.mulf %143, %121 : vector<8x32xf32>
    %148 = arith.mulf %142, %146 : vector<8x32xf32>
    %149 = arith.addf %147, %148 : vector<8x32xf32>
    %150 = math.tanh %149 : vector<8x32xf32>
    %151 = arith.mulf %144, %150 : vector<8x32xf32>
    %152 = vector.broadcast %129 : i32 to vector<8x1xi32>
    %153 = arith.cmpi slt, %152, %11 : vector<8x1xi32>
    %154 = vector.shape_cast %153 : vector<8x1xi1> to vector<8x1xi1>
    %155 = vector.broadcast %154 : vector<8x1xi1> to vector<8x32xi1>
    %156 = arith.select %155, %151, %118 : vector<8x32xi1>, vector<8x32xf32>
    %157 = vector.shape_cast %153 : vector<8x1xi1> to vector<8x1xi1>
    %158 = vector.broadcast %157 : vector<8x1xi1> to vector<8x32xi1>
    %159 = arith.select %158, %149, %121 : vector<8x32xi1>, vector<8x32xf32>
    %cst_40 = arith.constant 0.000000e+00 : f32
    %160 = vector.shape_cast %153 : vector<8x1xi1> to vector<8x1xi1>
    %161 = vector.broadcast %160 : vector<8x1xi1> to vector<8x32xi1>
    %162 = vector.broadcast %cst_40 : f32 to vector<8x32xf32>
    %163 = arith.select %161, %151, %162 : vector<8x32xi1>, vector<8x32xf32>
    %164 = arith.addf %126, %163 : vector<8x32xf32>
    %c4_i32 = arith.constant 4 : i32
    %c0_i32_41 = arith.constant 0 : i32
    %165 = arith.cmpi eq, %arg0, %c0_i32_41 : i32
    %c7_i32_42 = arith.constant 7 : i32
    %166 = arith.subi %c7_i32_42, %c4_i32 : i32
    %167 = arith.select %165, %c4_i32, %166 : i32
    %c8_i32_43 = arith.constant 8 : i32
    %168 = arith.muli %167, %c8_i32_43 : i32
    %169 = tpu.assume_multiple %168, 8 : i32
    %170 = arith.index_cast %169 : i32 to index
    %c0_44 = arith.constant 0 : index
    %171 = vector.load %arg7[%170, %c0_44] : memref<64x128xf32, #tpu.memory_space<vmem>>, vector<8x128xf32>
    %cst_45 = arith.constant dense<0.000000e+00> : vector<8x128xf32>
    %172 = tpu.matmul %156, %10, %cst_45 {dimension_numbers = #tpu.dot_dimension_numbers<[1], [0], [0], [1], [0, 0, 1, 1], [], []>} : vector<8x32xf32>, vector<32x128xf32>, vector<8x128xf32> -> vector<8x128xf32>
    %173 = arith.addf %171, %172 : vector<8x128xf32>
    %174 = vector.extract_strided_slice %173 {offsets = [0, 0], sizes = [8, 96], strides = [1, 1]} : vector<8x128xf32> to vector<8x96xf32>
    %175 = arith.negf %174 : vector<8x96xf32>
    %176 = math.exp %175 : vector<8x96xf32>
    %cst_46 = arith.constant 1.000000e+00 : f32
    %177 = vector.broadcast %cst_46 : f32 to vector<8x96xf32>
    %178 = arith.addf %177, %176 : vector<8x96xf32>
    %179 = arith.divf %177, %178 : vector<8x96xf32>
    %180 = vector.extract_strided_slice %179 {offsets = [0, 0], sizes = [8, 32], strides = [1, 1]} : vector<8x96xf32> to vector<8x32xf32>
    %181 = vector.extract_strided_slice %179 {offsets = [0, 32], sizes = [8, 32], strides = [1, 1]} : vector<8x96xf32> to vector<8x32xf32>
    %182 = vector.extract_strided_slice %179 {offsets = [0, 64], sizes = [8, 32], strides = [1, 1]} : vector<8x96xf32> to vector<8x32xf32>
    %183 = vector.extract_strided_slice %173 {offsets = [0, 96], sizes = [8, 32], strides = [1, 1]} : vector<8x128xf32> to vector<8x32xf32>
    %184 = math.tanh %183 : vector<8x32xf32>
    %185 = arith.mulf %181, %159 : vector<8x32xf32>
    %186 = arith.mulf %180, %184 : vector<8x32xf32>
    %187 = arith.addf %185, %186 : vector<8x32xf32>
    %188 = math.tanh %187 : vector<8x32xf32>
    %189 = arith.mulf %182, %188 : vector<8x32xf32>
    %190 = vector.broadcast %167 : i32 to vector<8x1xi32>
    %191 = arith.cmpi slt, %190, %11 : vector<8x1xi32>
    %192 = vector.shape_cast %191 : vector<8x1xi1> to vector<8x1xi1>
    %193 = vector.broadcast %192 : vector<8x1xi1> to vector<8x32xi1>
    %194 = arith.select %193, %189, %156 : vector<8x32xi1>, vector<8x32xf32>
    %195 = vector.shape_cast %191 : vector<8x1xi1> to vector<8x1xi1>
    %196 = vector.broadcast %195 : vector<8x1xi1> to vector<8x32xi1>
    %197 = arith.select %196, %187, %159 : vector<8x32xi1>, vector<8x32xf32>
    %cst_47 = arith.constant 0.000000e+00 : f32
    %198 = vector.shape_cast %191 : vector<8x1xi1> to vector<8x1xi1>
    %199 = vector.broadcast %198 : vector<8x1xi1> to vector<8x32xi1>
    %200 = vector.broadcast %cst_47 : f32 to vector<8x32xf32>
    %201 = arith.select %199, %189, %200 : vector<8x32xi1>, vector<8x32xf32>
    %202 = arith.addf %164, %201 : vector<8x32xf32>
    %c5_i32 = arith.constant 5 : i32
    %c0_i32_48 = arith.constant 0 : i32
    %203 = arith.cmpi eq, %arg0, %c0_i32_48 : i32
    %c7_i32_49 = arith.constant 7 : i32
    %204 = arith.subi %c7_i32_49, %c5_i32 : i32
    %205 = arith.select %203, %c5_i32, %204 : i32
    %c8_i32_50 = arith.constant 8 : i32
    %206 = arith.muli %205, %c8_i32_50 : i32
    %207 = tpu.assume_multiple %206, 8 : i32
    %208 = arith.index_cast %207 : i32 to index
    %c0_51 = arith.constant 0 : index
    %209 = vector.load %arg7[%208, %c0_51] : memref<64x128xf32, #tpu.memory_space<vmem>>, vector<8x128xf32>
    %cst_52 = arith.constant dense<0.000000e+00> : vector<8x128xf32>
    %210 = tpu.matmul %194, %10, %cst_52 {dimension_numbers = #tpu.dot_dimension_numbers<[1], [0], [0], [1], [0, 0, 1, 1], [], []>} : vector<8x32xf32>, vector<32x128xf32>, vector<8x128xf32> -> vector<8x128xf32>
    %211 = arith.addf %209, %210 : vector<8x128xf32>
    %212 = vector.extract_strided_slice %211 {offsets = [0, 0], sizes = [8, 96], strides = [1, 1]} : vector<8x128xf32> to vector<8x96xf32>
    %213 = arith.negf %212 : vector<8x96xf32>
    %214 = math.exp %213 : vector<8x96xf32>
    %cst_53 = arith.constant 1.000000e+00 : f32
    %215 = vector.broadcast %cst_53 : f32 to vector<8x96xf32>
    %216 = arith.addf %215, %214 : vector<8x96xf32>
    %217 = arith.divf %215, %216 : vector<8x96xf32>
    %218 = vector.extract_strided_slice %217 {offsets = [0, 0], sizes = [8, 32], strides = [1, 1]} : vector<8x96xf32> to vector<8x32xf32>
    %219 = vector.extract_strided_slice %217 {offsets = [0, 32], sizes = [8, 32], strides = [1, 1]} : vector<8x96xf32> to vector<8x32xf32>
    %220 = vector.extract_strided_slice %217 {offsets = [0, 64], sizes = [8, 32], strides = [1, 1]} : vector<8x96xf32> to vector<8x32xf32>
    %221 = vector.extract_strided_slice %211 {offsets = [0, 96], sizes = [8, 32], strides = [1, 1]} : vector<8x128xf32> to vector<8x32xf32>
    %222 = math.tanh %221 : vector<8x32xf32>
    %223 = arith.mulf %219, %197 : vector<8x32xf32>
    %224 = arith.mulf %218, %222 : vector<8x32xf32>
    %225 = arith.addf %223, %224 : vector<8x32xf32>
    %226 = math.tanh %225 : vector<8x32xf32>
    %227 = arith.mulf %220, %226 : vector<8x32xf32>
    %228 = vector.broadcast %205 : i32 to vector<8x1xi32>
    %229 = arith.cmpi slt, %228, %11 : vector<8x1xi32>
    %230 = vector.shape_cast %229 : vector<8x1xi1> to vector<8x1xi1>
    %231 = vector.broadcast %230 : vector<8x1xi1> to vector<8x32xi1>
    %232 = arith.select %231, %227, %194 : vector<8x32xi1>, vector<8x32xf32>
    %233 = vector.shape_cast %229 : vector<8x1xi1> to vector<8x1xi1>
    %234 = vector.broadcast %233 : vector<8x1xi1> to vector<8x32xi1>
    %235 = arith.select %234, %225, %197 : vector<8x32xi1>, vector<8x32xf32>
    %cst_54 = arith.constant 0.000000e+00 : f32
    %236 = vector.shape_cast %229 : vector<8x1xi1> to vector<8x1xi1>
    %237 = vector.broadcast %236 : vector<8x1xi1> to vector<8x32xi1>
    %238 = vector.broadcast %cst_54 : f32 to vector<8x32xf32>
    %239 = arith.select %237, %227, %238 : vector<8x32xi1>, vector<8x32xf32>
    %240 = arith.addf %202, %239 : vector<8x32xf32>
    %c6_i32 = arith.constant 6 : i32
    %c0_i32_55 = arith.constant 0 : i32
    %241 = arith.cmpi eq, %arg0, %c0_i32_55 : i32
    %c7_i32_56 = arith.constant 7 : i32
    %242 = arith.subi %c7_i32_56, %c6_i32 : i32
    %243 = arith.select %241, %c6_i32, %242 : i32
    %c8_i32_57 = arith.constant 8 : i32
    %244 = arith.muli %243, %c8_i32_57 : i32
    %245 = tpu.assume_multiple %244, 8 : i32
    %246 = arith.index_cast %245 : i32 to index
    %c0_58 = arith.constant 0 : index
    %247 = vector.load %arg7[%246, %c0_58] : memref<64x128xf32, #tpu.memory_space<vmem>>, vector<8x128xf32>
    %cst_59 = arith.constant dense<0.000000e+00> : vector<8x128xf32>
    %248 = tpu.matmul %232, %10, %cst_59 {dimension_numbers = #tpu.dot_dimension_numbers<[1], [0], [0], [1], [0, 0, 1, 1], [], []>} : vector<8x32xf32>, vector<32x128xf32>, vector<8x128xf32> -> vector<8x128xf32>
    %249 = arith.addf %247, %248 : vector<8x128xf32>
    %250 = vector.extract_strided_slice %249 {offsets = [0, 0], sizes = [8, 96], strides = [1, 1]} : vector<8x128xf32> to vector<8x96xf32>
    %251 = arith.negf %250 : vector<8x96xf32>
    %252 = math.exp %251 : vector<8x96xf32>
    %cst_60 = arith.constant 1.000000e+00 : f32
    %253 = vector.broadcast %cst_60 : f32 to vector<8x96xf32>
    %254 = arith.addf %253, %252 : vector<8x96xf32>
    %255 = arith.divf %253, %254 : vector<8x96xf32>
    %256 = vector.extract_strided_slice %255 {offsets = [0, 0], sizes = [8, 32], strides = [1, 1]} : vector<8x96xf32> to vector<8x32xf32>
    %257 = vector.extract_strided_slice %255 {offsets = [0, 32], sizes = [8, 32], strides = [1, 1]} : vector<8x96xf32> to vector<8x32xf32>
    %258 = vector.extract_strided_slice %255 {offsets = [0, 64], sizes = [8, 32], strides = [1, 1]} : vector<8x96xf32> to vector<8x32xf32>
    %259 = vector.extract_strided_slice %249 {offsets = [0, 96], sizes = [8, 32], strides = [1, 1]} : vector<8x128xf32> to vector<8x32xf32>
    %260 = math.tanh %259 : vector<8x32xf32>
    %261 = arith.mulf %257, %235 : vector<8x32xf32>
    %262 = arith.mulf %256, %260 : vector<8x32xf32>
    %263 = arith.addf %261, %262 : vector<8x32xf32>
    %264 = math.tanh %263 : vector<8x32xf32>
    %265 = arith.mulf %258, %264 : vector<8x32xf32>
    %266 = vector.broadcast %243 : i32 to vector<8x1xi32>
    %267 = arith.cmpi slt, %266, %11 : vector<8x1xi32>
    %268 = vector.shape_cast %267 : vector<8x1xi1> to vector<8x1xi1>
    %269 = vector.broadcast %268 : vector<8x1xi1> to vector<8x32xi1>
    %270 = arith.select %269, %265, %232 : vector<8x32xi1>, vector<8x32xf32>
    %271 = vector.shape_cast %267 : vector<8x1xi1> to vector<8x1xi1>
    %272 = vector.broadcast %271 : vector<8x1xi1> to vector<8x32xi1>
    %273 = arith.select %272, %263, %235 : vector<8x32xi1>, vector<8x32xf32>
    %cst_61 = arith.constant 0.000000e+00 : f32
    %274 = vector.shape_cast %267 : vector<8x1xi1> to vector<8x1xi1>
    %275 = vector.broadcast %274 : vector<8x1xi1> to vector<8x32xi1>
    %276 = vector.broadcast %cst_61 : f32 to vector<8x32xf32>
    %277 = arith.select %275, %265, %276 : vector<8x32xi1>, vector<8x32xf32>
    %278 = arith.addf %240, %277 : vector<8x32xf32>
    %c7_i32_62 = arith.constant 7 : i32
    %c0_i32_63 = arith.constant 0 : i32
    %279 = arith.cmpi eq, %arg0, %c0_i32_63 : i32
    %c7_i32_64 = arith.constant 7 : i32
    %280 = arith.subi %c7_i32_64, %c7_i32_62 : i32
    %281 = arith.select %279, %c7_i32_62, %280 : i32
    %c8_i32_65 = arith.constant 8 : i32
    %282 = arith.muli %281, %c8_i32_65 : i32
    %283 = tpu.assume_multiple %282, 8 : i32
    %284 = arith.index_cast %283 : i32 to index
    %c0_66 = arith.constant 0 : index
    %285 = vector.load %arg7[%284, %c0_66] : memref<64x128xf32, #tpu.memory_space<vmem>>, vector<8x128xf32>
    %cst_67 = arith.constant dense<0.000000e+00> : vector<8x128xf32>
    %286 = tpu.matmul %270, %10, %cst_67 {dimension_numbers = #tpu.dot_dimension_numbers<[1], [0], [0], [1], [0, 0, 1, 1], [], []>} : vector<8x32xf32>, vector<32x128xf32>, vector<8x128xf32> -> vector<8x128xf32>
    %287 = arith.addf %285, %286 : vector<8x128xf32>
    %288 = vector.extract_strided_slice %287 {offsets = [0, 0], sizes = [8, 96], strides = [1, 1]} : vector<8x128xf32> to vector<8x96xf32>
    %289 = arith.negf %288 : vector<8x96xf32>
    %290 = math.exp %289 : vector<8x96xf32>
    %cst_68 = arith.constant 1.000000e+00 : f32
    %291 = vector.broadcast %cst_68 : f32 to vector<8x96xf32>
    %292 = arith.addf %291, %290 : vector<8x96xf32>
    %293 = arith.divf %291, %292 : vector<8x96xf32>
    %294 = vector.extract_strided_slice %293 {offsets = [0, 0], sizes = [8, 32], strides = [1, 1]} : vector<8x96xf32> to vector<8x32xf32>
    %295 = vector.extract_strided_slice %293 {offsets = [0, 32], sizes = [8, 32], strides = [1, 1]} : vector<8x96xf32> to vector<8x32xf32>
    %296 = vector.extract_strided_slice %293 {offsets = [0, 64], sizes = [8, 32], strides = [1, 1]} : vector<8x96xf32> to vector<8x32xf32>
    %297 = vector.extract_strided_slice %287 {offsets = [0, 96], sizes = [8, 32], strides = [1, 1]} : vector<8x128xf32> to vector<8x32xf32>
    %298 = math.tanh %297 : vector<8x32xf32>
    %299 = arith.mulf %295, %273 : vector<8x32xf32>
    %300 = arith.mulf %294, %298 : vector<8x32xf32>
    %301 = arith.addf %299, %300 : vector<8x32xf32>
    %302 = math.tanh %301 : vector<8x32xf32>
    %303 = arith.mulf %296, %302 : vector<8x32xf32>
    %304 = vector.broadcast %281 : i32 to vector<8x1xi32>
    %305 = arith.cmpi slt, %304, %11 : vector<8x1xi32>
    %306 = vector.shape_cast %305 : vector<8x1xi1> to vector<8x1xi1>
    %307 = vector.broadcast %306 : vector<8x1xi1> to vector<8x32xi1>
    %308 = arith.select %307, %303, %270 : vector<8x32xi1>, vector<8x32xf32>
    %309 = vector.shape_cast %305 : vector<8x1xi1> to vector<8x1xi1>
    %310 = vector.broadcast %309 : vector<8x1xi1> to vector<8x32xi1>
    %311 = arith.select %310, %301, %273 : vector<8x32xi1>, vector<8x32xf32>
    %cst_69 = arith.constant 0.000000e+00 : f32
    %312 = vector.shape_cast %305 : vector<8x1xi1> to vector<8x1xi1>
    %313 = vector.broadcast %312 : vector<8x1xi1> to vector<8x32xi1>
    %314 = vector.broadcast %cst_69 : f32 to vector<8x32xf32>
    %315 = arith.select %313, %303, %314 : vector<8x32xi1>, vector<8x32xf32>
    %316 = arith.addf %278, %315 : vector<8x32xf32>
    %c8_i32_70 = arith.constant 8 : i32
    %c0_71 = arith.constant 0 : index
    %c0_72 = arith.constant 0 : index
    %c0_73 = arith.constant 0 : index
    %317 = vector.load %arg6[%c0_71, %c0_72, %c0_73] : memref<1x8x32xf32, #tpu.memory_space<vmem>>, vector<1x8x32xf32>
    %318 = vector.shape_cast %317 : vector<1x8x32xf32> to vector<8x32xf32>
    %319 = vector.shape_cast %316 : vector<8x32xf32> to vector<1x8x32xf32>
    tpu.vector_store %arg6[%c0_71, %c0_72, %c0_73], %319 {strides = array<i32>} : memref<1x8x32xf32, #tpu.memory_space<vmem>>, vector<1x8x32xf32>,
    return
  }
  func.func @transform_0(%arg0: i32) -> (i32, i32) {
    %c0_i32 = arith.constant 0 : i32
    %c0_i32_0 = arith.constant 0 : i32
    %c0_i32_1 = arith.constant 0 : i32
    return %c0_i32, %c0_i32_0 : i32, i32
  }
  func.func @transform_1(%arg0: i32) -> (i32, i32) {
    %c0_i32 = arith.constant 0 : i32
    %c0_i32_0 = arith.constant 0 : i32
    %c0_i32_1 = arith.constant 0 : i32
    return %c0_i32, %c0_i32_0 : i32, i32
  }
  func.func @transform_2(%arg0: i32) -> (i32, i32, i32) {
    %c0_i32 = arith.constant 0 : i32
    %c0_i32_0 = arith.constant 0 : i32
    %c0_i32_1 = arith.constant 0 : i32
    return %arg0, %c0_i32, %c0_i32_0 : i32, i32, i32
  }
  func.func @transform_3(%arg0: i32) -> (i32, i32, i32) {
    %c0_i32 = arith.constant 0 : i32
    %c0_i32_0 = arith.constant 0 : i32
    %c0_i32_1 = arith.constant 0 : i32
    return %arg0, %c0_i32, %c0_i32_0 : i32, i32, i32
  }
  func.func @transform_4(%arg0: i32) -> (i32, i32, i32) {
    %c0_i32 = arith.constant 0 : i32
    %c0_i32_0 = arith.constant 0 : i32
    %c0_i32_1 = arith.constant 0 : i32
    return %arg0, %c0_i32, %c0_i32_0 : i32, i32, i32
  }
  func.func @transform_5(%arg0: i32) -> (i32, i32, i32) {
    %c0_i32 = arith.constant 0 : i32
    %c0_i32_0 = arith.constant 0 : i32
    %c0_i32_1 = arith.constant 0 : i32
    return %arg0, %c0_i32, %c0_i32_0 : i32, i32, i32
  }
}

</mosaic_0001>

<llo_original>
// kernel: article_encoder_forward.1
$region0: #{article_encoder_forward.1}
  #allocation0 [shape = 'u32[]', space=smem, size = 0x4, offset = 0x4, fixed_abs, tag = 'smem constant byte address 0x4 - core index']
  #allocation1 [shape = 'u32[144,128]{1,0:T(1,128)}', space=vmem, size = 0x12000, scoped, tag = 'internal scratch']
  #allocation2 [shape = 'f32[64,128]{1,0:T(8,128)}', space=vmem, size = 0x8000, scoped, tag = 'scratch operand']
  %s0 = inlined_call_operand.vmem [shape: f32[64,32], index: 0, kind: input, shape index: {}]
  %s1 = inlined_call_operand.vmem [shape: s32[8,1], index: 1, kind: input, shape index: {}]
  %s2 = inlined_call_operand.vmem [shape: f32[2,32,128], index: 2, kind: input, shape index: {}]
  %s3 = inlined_call_operand.vmem [shape: f32[2,32,128], index: 3, kind: input, shape index: {}]
  %s4 = inlined_call_operand.vmem [shape: f32[2,1,128], index: 4, kind: input, shape index: {}]
  %s5 = inlined_call_operand.vmem [shape: f32[2,8,32], index: 5, kind: output, shape index: {}]
  %s6 = sld [smem:[#allocation0]]
  $region53: #{article_encoder_forward.1} parent=0
    _
  %s8 = ssub.s32 1, %s6
  %s9 = scalar_select 0, %s8, %s6
  loop: start=0, step=1, limit=4
  $region2: #{article_encoder_forward.1} parent=0 // loop_pre_header
    _
  $region3: #{article_encoder_forward.1} parent=0 // loop_header
    %s11 = sphi 0, %s15
    %p12 = scmp.ge.s32.totalorder %s11, 4
    %s19 = sphi 0, %s19
    %s21 = sphi 0, %s19
    %s22 = sphi 0, %s21
    %s36 = sphi 0, %s22
    %s40 = sphi 0, %s40
    %s42 = sphi 0, %s40
    %s43 = sphi 0, %s42
    %s57 = sphi 0, %s43
    %s63 = sphi 0, %s65
    %s66 = sphi 0, %s63
    %s67 = sphi 0, %s66
    %s83 = sphi 0, %s67
    %s89 = sphi 0, %s91
    %s92 = sphi 0, %s89
    %s93 = sphi 0, %s92
    %s109 = sphi 0, %s93
    %s115 = sphi 0, %s117
    %s118 = sphi 0, %s115
    %s119 = sphi 0, %s118
    %s135 = sphi 0, %s119
    %s141 = sphi 0, %s143
    %s144 = sphi 0, %s141
    %s145 = sphi 0, %s144
    %s161 = sphi 0, %s145
  $region4: #{article_encoder_forward.1} parent=0 // loop_header_branch
    %14 = sbr.rel (%p12) target = $region8
  $region5: #{article_encoder_forward.1} parent=0 // loop_body
    %s16 = ssub.s32 %s11, 1
    %s17 = ssub.s32 %s11, 2
    %s18 = sadd.s32 %s11, 1
    %s20 = sadd.s32 %s19, 1
    %p23 = scmp.eq.s32.totalorder %s11, 1
    %p24 = scmp.ne.s32.totalorder %s19, %s21
    %p25 = scmp.eq.s32.totalorder %s11, 0
    %p26 = por %p24, %p25
    %p27 = scmp.ne.s32.totalorder %s19, %s21
    %p28 = scmp.eq.s32.totalorder %s16, 1
    %p29 = por %p27, %p28
    %p30 = scmp.ne.s32.totalorder %s21, %s22
    %p31 = scmp.eq.s32.totalorder %s16, 0
    %p32 = por %p30, %p31
    %p33 = scmp.ne.s32.totalorder %s21, %s22
    %p34 = scmp.eq.s32.totalorder %s17, 1
    %p35 = por %p33, %p34
    %p37 = scmp.ne.s32.totalorder %s22, %s36
    %p38 = scmp.eq.s32.totalorder %s17, 0
    %p39 = por %p37, %p38
    %s41 = sadd.s32 %s40, 1
    %p44 = scmp.eq.s32.totalorder %s11, 1
    %p45 = scmp.ne.s32.totalorder %s40, %s42
    %p46 = scmp.eq.s32.totalorder %s11, 0
    %p47 = por %p45, %p46
    %p48 = scmp.ne.s32.totalorder %s40, %s42
    %p49 = scmp.eq.s32.totalorder %s16, 1
    %p50 = por %p48, %p49
    %p51 = scmp.ne.s32.totalorder %s42, %s43
    %p52 = scmp.eq.s32.totalorder %s16, 0
    %p53 = por %p51, %p52
    %p54 = scmp.ne.s32.totalorder %s42, %s43
    %p55 = scmp.eq.s32.totalorder %s17, 1
    %p56 = por %p54, %p55
    %p58 = scmp.ne.s32.totalorder %s43, %s57
    %p59 = scmp.eq.s32.totalorder %s17, 0
    %p60 = por %p58, %p59
    %s61 = ssub.s32 %s11, %s18
    %p62 = scmp.eq.s32.totalorder %s61, 0
    %s64 = sadd.s32 %s63, 1
    %s65 = scalar_select %p62, %s63, %s64
    %p68 = pneg %p62
    %p69 = scmp.eq.s32.totalorder %s11, 1
    %p70 = por %p68, %p69
    %p71 = scmp.ne.s32.totalorder %s63, %s66
    %p72 = scmp.eq.s32.totalorder %s11, 0
    %p73 = por %p71, %p72
    %p74 = scmp.ne.s32.totalorder %s63, %s66
    %p75 = scmp.eq.s32.totalorder %s16, 1
    %p76 = por %p74, %p75
    %p77 = scmp.ne.s32.totalorder %s66, %s67
    %p78 = scmp.eq.s32.totalorder %s16, 0
    %p79 = por %p77, %p78
    %p80 = scmp.ne.s32.totalorder %s66, %s67
    %p81 = scmp.eq.s32.totalorder %s17, 1
    %p82 = por %p80, %p81
    %p84 = scmp.ne.s32.totalorder %s67, %s83
    %p85 = scmp.eq.s32.totalorder %s17, 0
    %p86 = por %p84, %p85
    %s87 = ssub.s32 %s11, %s18
    %p88 = scmp.eq.s32.totalorder %s87, 0
    %s90 = sadd.s32 %s89, 1
    %s91 = scalar_select %p88, %s89, %s90
    %p94 = pneg %p88
    %p95 = scmp.eq.s32.totalorder %s11, 1
    %p96 = por %p94, %p95
    %p97 = scmp.ne.s32.totalorder %s89, %s92
    %p98 = scmp.eq.s32.totalorder %s11, 0
    %p99 = por %p97, %p98
    %p100 = scmp.ne.s32.totalorder %s89, %s92
    %p101 = scmp.eq.s32.totalorder %s16, 1
    %p102 = por %p100, %p101
    %p103 = scmp.ne.s32.totalorder %s92, %s93
    %p104 = scmp.eq.s32.totalorder %s16, 0
    %p105 = por %p103, %p104
    %p106 = scmp.ne.s32.totalorder %s92, %s93
    %p107 = scmp.eq.s32.totalorder %s17, 1
    %p108 = por %p106, %p107
    %p110 = scmp.ne.s32.totalorder %s93, %s109
    %p111 = scmp.eq.s32.totalorder %s17, 0
    %p112 = por %p110, %p111
    %s113 = ssub.s32 %s11, %s18
    %p114 = scmp.eq.s32.totalorder %s113, 0
    %s116 = sadd.s32 %s115, 1
    %s117 = scalar_select %p114, %s115, %s116
    %p120 = pneg %p114
    %p121 = scmp.eq.s32.totalorder %s11, 1
    %p122 = por %p120, %p121
    %p123 = scmp.ne.s32.totalorder %s115, %s118
    %p124 = scmp.eq.s32.totalorder %s11, 0
    %p125 = por %p123, %p124
    %p126 = scmp.ne.s32.totalorder %s115, %s118
    %p127 = scmp.eq.s32.totalorder %s16, 1
    %p128 = por %p126, %p127
    %p129 = scmp.ne.s32.totalorder %s118, %s119
    %p130 = scmp.eq.s32.totalorder %s16, 0
    %p131 = por %p129, %p130
    %p132 = scmp.ne.s32.totalorder %s118, %s119
    %p133 = scmp.eq.s32.totalorder %s17, 1
    %p134 = por %p132, %p133
    %p136 = scmp.ne.s32.totalorder %s119, %s135
    %p137 = scmp.eq.s32.totalorder %s17, 0
    %p138 = por %p136, %p137
    %s139 = ssub.s32 %s11, %s18
    %p140 = scmp.eq.s32.totalorder %s139, 0
    %s142 = sadd.s32 %s141, 1
    %s143 = scalar_select %p140, %s141, %s142
    %p146 = pneg %p140
    %p147 = scmp.eq.s32.totalorder %s11, 1
    %p148 = por %p146, %p147
    %p149 = scmp.ne.s32.totalorder %s141, %s144
    %p150 = scmp.eq.s32.totalorder %s11, 0
    %p151 = por %p149, %p150
    %p152 = scmp.ne.s32.totalorder %s141, %s144
    %p153 = scmp.eq.s32.totalorder %s16, 1
    %p154 = por %p152, %p153
    %p155 = scmp.ne.s32.totalorder %s144, %s145
    %p156 = scmp.eq.s32.totalorder %s16, 0
    %p157 = por %p155, %p156
    %p158 = scmp.ne.s32.totalorder %s144, %s145
    %p159 = scmp.eq.s32.totalorder %s17, 1
    %p160 = por %p158, %p159
    %p162 = scmp.ne.s32.totalorder %s145, %s161
    %p163 = scmp.eq.s32.totalorder %s17, 0
    %p164 = por %p162, %p163
    %p165 = scmp.le.s32.totalorder 1, %s11
    %p166 = scmp.lt.s32.totalorder %s11, 3
    %p167 = pnand %p165, %p166
    %p168 = pneg %p167
    // Predicated region
    $region9: #{article_encoder_forward.1} parent=5 // pred_check
      _
    $region10: #{article_encoder_forward.1} parent=5 // pred_check_branch
      %170 = sbr.rel (%p167) target = $region12
    $region11: #{article_encoder_forward.1} parent=5 // pred_region
      %s171 = ssub.s32 %s11, 1
      // Predicated region
      $region13: #{article_encoder_forward.1} parent=11 // pred_check
        %p172 = pneg %p32
      $region14: #{article_encoder_forward.1} parent=11 // pred_check_branch
        %174 = sbr.rel (%p172) target = $region16
      $region15: #{article_encoder_forward.1} parent=11 // pred_region
        _
      $region16: #{article_encoder_forward.1} parent=11 // pred_fallthru
        _
      // Predicated region
      $region17: #{article_encoder_forward.1} parent=11 // pred_check
        %p175 = pneg %p53
      $region18: #{article_encoder_forward.1} parent=11 // pred_check_branch
        %177 = sbr.rel (%p175) target = $region20
      $region19: #{article_encoder_forward.1} parent=11 // pred_region
        _
      $region20: #{article_encoder_forward.1} parent=11 // pred_fallthru
        _
    $region12: #{article_encoder_forward.1} parent=5 // pred_fallthru
      _
    %p178 = scmp.lt.s32.totalorder %s11, 2
    // Predicated region
    $region21: #{article_encoder_forward.1} parent=5 // pred_check
      %p179 = pneg %p178
    $region22: #{article_encoder_forward.1} parent=5 // pred_check_branch
      %181 = sbr.rel (%p179) target = $region24
    $region23: #{article_encoder_forward.1} parent=5 // pred_region
      // Predicated region
      $region25: #{article_encoder_forward.1} parent=23 // pred_check
        %p182 = pneg %p73
      $region26: #{article_encoder_forward.1} parent=23 // pred_check_branch
        %184 = sbr.rel (%p182) target = $region28
      $region27: #{article_encoder_forward.1} parent=23 // pred_region
        %p185 = scmp.lt.s32.totalorder %s11, 1
        %s186 = scalar_select %p185, %s11, 1
        %s187 = smul.addr %s186, 4
        %s188 = smul.addr %s187, 8
        %s189 = scalar_lea.vmem %s2, %s188
      $region28: #{article_encoder_forward.1} parent=23 // pred_fallthru
        _
      // Predicated region
      $region29: #{article_encoder_forward.1} parent=23 // pred_check
        %p190 = pneg %p99
      $region30: #{article_encoder_forward.1} parent=23 // pred_check_branch
        %192 = sbr.rel (%p190) target = $region32
      $region31: #{article_encoder_forward.1} parent=23 // pred_region
        %p193 = scmp.lt.s32.totalorder %s11, 1
        %s194 = scalar_select %p193, %s11, 1
        %s195 = smul.addr %s194, 4
        %s196 = smul.addr %s195, 8
        %s197 = scalar_lea.vmem %s3, %s196
      $region32: #{article_encoder_forward.1} parent=23 // pred_fallthru
        _
      // Predicated region
      $region33: #{article_encoder_forward.1} parent=23 // pred_check
        %p198 = pneg %p125
      $region34: #{article_encoder_forward.1} parent=23 // pred_check_branch
        %200 = sbr.rel (%p198) target = $region36
      $region35: #{article_encoder_forward.1} parent=23 // pred_region
        %p201 = scmp.lt.s32.totalorder %s11, 1
        %s202 = scalar_select %p201, %s11, 1
        %s203 = scalar_lea.vmem %s4, %s202
      $region36: #{article_encoder_forward.1} parent=23 // pred_fallthru
        _
    $region24: #{article_encoder_forward.1} parent=5 // pred_fallthru
      _
    %p204 = scmp.le.s32.totalorder 1, %s11
    %p205 = scmp.lt.s32.totalorder %s11, 3
    %p206 = pnand %p204, %p205
    %p207 = pneg %p206
    // Predicated region
    $region37: #{article_encoder_forward.1} parent=5 // pred_check
      _
    $region38: #{article_encoder_forward.1} parent=5 // pred_check_branch
      %209 = sbr.rel (%p206) target = $region40
    $region39: #{article_encoder_forward.1} parent=5 // pred_region
      %s210 = ssub.s32 %s11, 1
      %p211 = pneg %p32
      %p212 = pneg %p29
      %p213 = pneg %p53
      %p214 = pneg %p50
      %p215 = scmp.lt.s32.totalorder %s16, 1
      %s216 = scalar_select %p215, %s16, 1
      %s217 = smul.addr %s216, 4
      %s218 = smul.addr %s217, 8
      %s219 = scalar_lea.vmem %s2, %s218
      %p220 = pneg %p79
      %p221 = pneg %p76
      %p222 = scmp.lt.s32.totalorder %s16, 1
      %s223 = scalar_select %p222, %s16, 1
      %s224 = smul.addr %s223, 4
      %s225 = smul.addr %s224, 8
      %s226 = scalar_lea.vmem %s3, %s225
      %p227 = pneg %p105
      %p228 = pneg %p102
      %p229 = scmp.lt.s32.totalorder %s16, 1
      %s230 = scalar_select %p229, %s16, 1
      %s231 = scalar_lea.vmem %s4, %s230
      %p232 = pneg %p131
      %p233 = pneg %p128
      %p234 = pneg %p157
      %p235 = pneg %p154
      %p236 = scmp.lt.s32.totalorder %s16, 1
      %s237 = scalar_select %p236, %s16, 1
      %s238 = smul.addr %s237, 8
      %s239 = scalar_lea.vmem %s5, %s238
      %p240 = scmp.lt.s32.totalorder %s16, 1
      %s241 = scalar_select %p240, %s16, 1
      %s242 = smul.addr %s241, 4
      %s243 = smul.addr %s242, 8
      %s244 = scalar_lea.vmem %s2, %s243
      %p245 = scmp.lt.s32.totalorder %s16, 1
      %s246 = scalar_select %p245, %s16, 1
      %s247 = smul.addr %s246, 4
      %s248 = smul.addr %s247, 8
      %s249 = scalar_lea.vmem %s3, %s248
      %p250 = scmp.lt.s32.totalorder %s16, 1
      %s251 = scalar_select %p250, %s16, 1
      %s252 = scalar_lea.vmem %s4, %s251
      %p253 = scmp.lt.s32.totalorder %s16, 1
      %s254 = scalar_select %p253, %s16, 1
      %s255 = smul.addr %s254, 8
      %s256 = scalar_lea.vmem %s5, %s255
      %v257 = vld [vmem:[%s0] sm:$0xff]
      %v258 = vld [vmem:[%s0 + $0x8] sm:$0xff]
      %v259 = vld [vmem:[%s0 + $0x10] sm:$0xff]
      %v260 = vld [vmem:[%s0 + $0x18] sm:$0xff]
      %v261 = vld [vmem:[%s0 + $0x20] sm:$0xff]
      %v262 = vld [vmem:[%s0 + $0x28] sm:$0xff]
      %v263 = vld [vmem:[%s0 + $0x30] sm:$0xff]
      %v264 = vld [vmem:[%s0 + $0x38] sm:$0xff]
      %v265 = vld [vmem:[%s244] sm:$0xff]
      %v266 = vld [vmem:[%s244 + $0x8] sm:$0xff]
      %v267 = vld [vmem:[%s244 + $0x10] sm:$0xff]
      %v268 = vld [vmem:[%s244 + $0x18] sm:$0xff]
      %v269 = vld [vmem:[%s252] sm:$0x1]
      %v271 = vlaneseq
      %v272 = vshrl.u32 %v271, 7
      %v273 = vsub.s32 0, %v272
      %v274 = vrot.slane %v269, %v273
      %vm276 = vcmask 261120
      %v278 = vsel %vm276, %v257, 0
      %v281 = vsel %vm276, %v258, 0
      %v284 = vsel %vm276, %v259, 0
      %v287 = vsel %vm276, %v260, 0
      %v290 = vsel %vm276, %v261, 0
      %v293 = vsel %vm276, %v262, 0
      %v296 = vsel %vm276, %v263, 0
      %v299 = vsel %vm276, %v264, 0
      %301 = vmatprep.subr.mxu0 0.0
      %302 = vmatpush1.msra.mxu0 %v265
      %303 = vmatprep.subr.mxu0 0.0
      %304 = vmatpush1.msra.mxu0 %v266
      %305 = vmatprep.subr.mxu0 0.0
      %306 = vmatpush1.msra.mxu0 %v267
      %307 = vmatprep.subr.mxu0 0.0
      %308 = vmatpush1.msra.mxu0 %v268
      %309 = vmatprep.subr.mxu0 0.0
      %310 = vmatpush1.msra.mxu0 0.0
      %311 = vmatprep.subr.mxu0 0.0
      %312 = vmatpush1.msra.mxu0 0.0
      %313 = vmatprep.subr.mxu0 0.0
      %314 = vmatpush1.msra.mxu0 0.0
      %315 = vmatprep.subr.mxu0 0.0
      %316 = vmatpush1.msra.mxu0 0.0
      %317 = vmatprep.subr.mxu0 0.0
      %318 = vmatpush1.msra.mxu0 0.0
      %319 = vmatprep.subr.mxu0 0.0
      %320 = vmatpush1.msra.mxu0 0.0
      %321 = vmatprep.subr.mxu0 0.0
      %322 = vmatpush1.msra.mxu0 0.0
      %323 = vmatprep.subr.mxu0 0.0
      %324 = vmatpush1.msra.mxu0 0.0
      %325 = vmatprep.subr.mxu0 0.0
      %326 = vmatpush1.msra.mxu0 0.0
      %327 = vmatprep.subr.mxu0 0.0
      %328 = vmatpush1.msra.mxu0 0.0
      %329 = vmatprep.subr.mxu0 0.0
      %330 = vmatpush1.msra.mxu0 0.0
      %331 = vmatprep.subr.mxu0 0.0
      %332 = vmatpush1.msra.mxu0 0.0
      %333 = vmatprep.subr.mxu0 0.0
      %334 = vmatpush1.msra.mxu0 0.0
      %335 = vmatprep.subr.mxu0 0.0
      %336 = vmatpush1.msra.mxu0 0.0
      %337 = vmatprep.subr.mxu0 0.0
      %338 = vmatpush1.msra.mxu0 0.0
      %339 = vmatprep.subr.mxu0 0.0
      %340 = vmatpush1.msra.mxu0 0.0
      %341 = vmatprep.subr.mxu0 0.0
      %342 = vmatpush1.msra.mxu0 0.0
      %343 = vmatprep.subr.mxu0 0.0
      %344 = vmatpush1.msra.mxu0 0.0
      %345 = vmatprep.subr.mxu0 0.0
      %346 = vmatpush1.msra.mxu0 0.0
      %347 = vmatprep.subr.mxu0 0.0
      %348 = vmatpush1.msra.mxu0 0.0
      %349 = vmatprep.subr.mxu0 0.0
      %350 = vmatpush1.msra.mxu0 0.0
      %351 = vmatprep.subr.mxu0 0.0
      %352 = vmatpush1.msra.mxu0 0.0
      %353 = vmatprep.subr.mxu0 0.0
      %354 = vmatpush1.msra.mxu0 0.0
      %355 = vmatprep.subr.mxu0 0.0
      %356 = vmatpush1.msra.mxu0 0.0
      %357 = vmatprep.subr.mxu0 0.0
      %358 = vmatpush1.msra.mxu0 0.0
      %359 = vmatprep.subr.mxu0 0.0
      %360 = vmatpush1.msra.mxu0 0.0
      %361 = vmatprep.subr.mxu0 0.0
      %362 = vmatpush1.msra.mxu0 0.0
      %363 = vmatprep.subr.mxu0 0.0
      %364 = vmatpush1.msra.mxu0 0.0
      %365 = vmatprep.mubr.f32.mxu0 0.0
      %366 = vmatmul.mubr.f32.gmra.mrb[0].mxu0 %v278
      %v367 = vpop.f32.mrb[0].mxu0
      %v368 = vadd.f32 %v274, %v367
      %v369 = vpop.f32.mrb[0].mxu0
      %370 = vmatprep.mubr.f32.mxu0 0.0
      %371 = vmatmul.mubr.f32.gmra.mrb[0].mxu0 %v281
      %v372 = vpop.f32.mrb[0].mxu0
      %v373 = vadd.f32 %v274, %v372
      %v374 = vpop.f32.mrb[0].mxu0
      %375 = vmatprep.mubr.f32.mxu0 0.0
      %376 = vmatmul.mubr.f32.gmra.mrb[0].mxu0 %v284
      %v377 = vpop.f32.mrb[0].mxu0
      %v378 = vadd.f32 %v274, %v377
      %v379 = vpop.f32.mrb[0].mxu0
      %380 = vmatprep.mubr.f32.mxu0 0.0
      %381 = vmatmul.mubr.f32.gmra.mrb[0].mxu0 %v287
      %v382 = vpop.f32.mrb[0].mxu0
      %v383 = vadd.f32 %v274, %v382
      %v384 = vpop.f32.mrb[0].mxu0
      %385 = vmatprep.mubr.f32.mxu0 0.0
      %386 = vmatmul.mubr.f32.gmra.mrb[0].mxu0 %v290
      %v387 = vpop.f32.mrb[0].mxu0
      %v388 = vadd.f32 %v274, %v387
      %v389 = vpop.f32.mrb[0].mxu0
      %390 = vmatprep.mubr.f32.mxu0 0.0
      %391 = vmatmul.mubr.f32.gmra.mrb[0].mxu0 %v293
      %v392 = vpop.f32.mrb[0].mxu0
      %v393 = vadd.f32 %v274, %v392
      %v394 = vpop.f32.mrb[0].mxu0
      %395 = vmatprep.mubr.f32.mxu0 0.0
      %396 = vmatmul.mubr.f32.gmra.mrb[0].mxu0 %v296
      %v397 = vpop.f32.mrb[0].mxu0
      %v398 = vadd.f32 %v274, %v397
      %v399 = vpop.f32.mrb[0].mxu0
      %400 = vmatprep.mubr.f32.mxu0 0.0
      %401 = vmatmul.mubr.f32.gmra.mrb[0].mxu0 %v299
      %v402 = vpop.f32.mrb[0].mxu0
      %v403 = vadd.f32 %v274, %v402
      %v404 = vpop.f32.mrb[0].mxu0
      %405 = vdwg.mxu0
      %406 = vst [vmem:[#allocation2] sm:$0xff] %v368
      %407 = vst [vmem:[#allocation2 + $0x8] sm:$0xff] %v373
      %408 = vst [vmem:[#allocation2 + $0x10] sm:$0xff] %v378
      %409 = vst [vmem:[#allocation2 + $0x18] sm:$0xff] %v383
      %410 = vst [vmem:[#allocation2 + $0x20] sm:$0xff] %v388
      %411 = vst [vmem:[#allocation2 + $0x28] sm:$0xff] %v393
      %412 = vst [vmem:[#allocation2 + $0x30] sm:$0xff] %v398
      %413 = vst [vmem:[#allocation2 + $0x38] sm:$0xff] %v403
      %v414 = vld [vmem:[%s249] sm:$0xff]
      %v415 = vld [vmem:[%s249 + $0x8] sm:$0xff]
      %v416 = vld [vmem:[%s249 + $0x10] sm:$0xff]
      %v417 = vld [vmem:[%s249 + $0x18] sm:$0xff]
      %v418 = vld [vmem:[%s1] sm:$0xff]
      %p419 = scmp.eq.s32.totalorder %s16, 0
      %s420 = scalar_select %p419, 0, 7
      %s421 = smul.u32 %s420, 8
      %s422 = scalar_lea.vmem [#allocation2], %s421
      %v423 = vld [vmem:[%s422] sm:$0xff]
      %v425 = vsel %vm276, 0.0, 0
      %427 = vmatprep.subr.mxu0 0.0
      %428 = vmatpush1.msra.mxu0 %v414
      %429 = vmatprep.subr.mxu0 0.0
      %430 = vmatpush1.msra.mxu0 %v415
      %431 = vmatprep.subr.mxu0 0.0
      %432 = vmatpush1.msra.mxu0 %v416
      %433 = vmatprep.subr.mxu0 0.0
      %434 = vmatpush1.msra.mxu0 %v417
      %435 = vmatprep.subr.mxu0 0.0
      %436 = vmatpush1.msra.mxu0 0.0
      %437 = vmatprep.subr.mxu0 0.0
      %438 = vmatpush1.msra.mxu0 0.0
      %439 = vmatprep.subr.mxu0 0.0
      %440 = vmatpush1.msra.mxu0 0.0
      %441 = vmatprep.subr.mxu0 0.0
      %442 = vmatpush1.msra.mxu0 0.0
      %443 = vmatprep.subr.mxu0 0.0
      %444 = vmatpush1.msra.mxu0 0.0
      %445 = vmatprep.subr.mxu0 0.0
      %446 = vmatpush1.msra.mxu0 0.0
      %447 = vmatprep.subr.mxu0 0.0
      %448 = vmatpush1.msra.mxu0 0.0
      %449 = vmatprep.subr.mxu0 0.0
      %450 = vmatpush1.msra.mxu0 0.0
      %451 = vmatprep.subr.mxu0 0.0
      %452 = vmatpush1.msra.mxu0 0.0
      %453 = vmatprep.subr.mxu0 0.0
      %454 = vmatpush1.msra.mxu0 0.0
      %455 = vmatprep.subr.mxu0 0.0
      %456 = vmatpush1.msra.mxu0 0.0
      %457 = vmatprep.subr.mxu0 0.0
      %458 = vmatpush1.msra.mxu0 0.0
      %459 = vmatprep.subr.mxu0 0.0
      %460 = vmatpush1.msra.mxu0 0.0
      %461 = vmatprep.subr.mxu0 0.0
      %462 = vmatpush1.msra.mxu0 0.0
      %463 = vmatprep.subr.mxu0 0.0
      %464 = vmatpush1.msra.mxu0 0.0
      %465 = vmatprep.subr.mxu0 0.0
      %466 = vmatpush1.msra.mxu0 0.0
      %467 = vmatprep.subr.mxu0 0.0
      %468 = vmatpush1.msra.mxu0 0.0
      %469 = vmatprep.subr.mxu0 0.0
      %470 = vmatpush1.msra.mxu0 0.0
      %471 = vmatprep.subr.mxu0 0.0
      %472 = vmatpush1.msra.mxu0 0.0
      %473 = vmatprep.subr.mxu0 0.0
      %474 = vmatpush1.msra.mxu0 0.0
      %475 = vmatprep.subr.mxu0 0.0
      %476 = vmatpush1.msra.mxu0 0.0
      %477 = vmatprep.subr.mxu0 0.0
      %478 = vmatpush1.msra.mxu0 0.0
      %479 = vmatprep.subr.mxu0 0.0
      %480 = vmatpush1.msra.mxu0 0.0
      %481 = vmatprep.subr.mxu0 0.0
      %482 = vmatpush1.msra.mxu0 0.0
      %483 = vmatprep.subr.mxu0 0.0
      %484 = vmatpush1.msra.mxu0 0.0
      %485 = vmatprep.subr.mxu0 0.0
      %486 = vmatpush1.msra.mxu0 0.0
      %487 = vmatprep.subr.mxu0 0.0
      %488 = vmatpush1.msra.mxu0 0.0
      %489 = vmatprep.subr.mxu0 0.0
      %490 = vmatpush1.msra.mxu0 0.0
      %491 = vmatprep.mubr.f32.mxu0 0.0
      %492 = vmatmul.mubr.f32.gmra.mrb[0].mxu0 %v425
      %v493 = vpop.f32.mrb[0].mxu0
      %v494 = vadd.f32 0.0, %v493
      %v495 = vpop.f32.mrb[0].mxu0
      %496 = vdwg.mxu0
      %v497 = vadd.f32 %v423, %v494
      %v498 = vxor.u32 %v497, 2147483648
      %v499 = vmul.f32 %v498, 1.442695
      %v500 = vpow.pop %v499
      %v501 = vadd.f32 %v500, 1.0
      %v502 = vrcp.pop %v501
      %v503 = vmul.f32 1.0, %v502
      %v504 = vtanh.pop %v497
      %v505 = vmul.f32 %v503, 0.0
      %507 = vrot.lane.b32.xlu0 %v504, 32
      %v508 = vpop.permute.xlu0 %507
      %v510 = vmul.f32 %v503, %v508
      %512 = vrot.lane.b32.xlu0 %v510, 32
      %v513 = vpop.permute.xlu0 %512
      %v515 = vadd.f32 %v505, %v513
      %v516 = vtanh.pop %v515
      %518 = vrot.lane.b32.xlu0 %v516, 32
      %v519 = vpop.permute.xlu0 %518
      %v521 = vmul.f32 %v503, %v519
      %v522 = vstv %s420
      %vm523 = vcmp.lt.s32.totalorder %v522, %v418
      %v524 = vsel %vm523, 1, 0
      %525 = vset.pattern.permute.xlu0 0
      %526 = vperm.xlu0 %525, %v524
      %v527 = vpop.permute.xlu0 %526
      %vm528 = vcmp.eq.s32.totalorder %v527, 1
      %v529 = vsel %vm528, %v521, 0.0
      %v530 = vsel %vm528, %v515, 0.0
      %v531 = vadd.f32 %v529, 0.0
      %s532 = scalar_select %p419, 1, 6
      %s533 = smul.u32 %s532, 8
      %s534 = scalar_lea.vmem [#allocation2], %s533
      %v535 = vld [vmem:[%s534] sm:$0xff]
      %537 = vrot.lane.b32.xlu0 %v529, 64
      %v538 = vpop.permute.xlu0 %537
      %v539 = vsel %vm276, %v538, 0
      %541 = vmatprep.subr.mxu0 0.0
      %542 = vmatpush1.msra.mxu0 %v414
      %543 = vmatprep.subr.mxu0 0.0
      %544 = vmatpush1.msra.mxu0 %v415
      %545 = vmatprep.subr.mxu0 0.0
      %546 = vmatpush1.msra.mxu0 %v416
      %547 = vmatprep.subr.mxu0 0.0
      %548 = vmatpush1.msra.mxu0 %v417
      %549 = vmatprep.subr.mxu0 0.0
      %550 = vmatpush1.msra.mxu0 0.0
      %551 = vmatprep.subr.mxu0 0.0
      %552 = vmatpush1.msra.mxu0 0.0
      %553 = vmatprep.subr.mxu0 0.0
      %554 = vmatpush1.msra.mxu0 0.0
      %555 = vmatprep.subr.mxu0 0.0
      %556 = vmatpush1.msra.mxu0 0.0
      %557 = vmatprep.subr.mxu0 0.0
      %558 = vmatpush1.msra.mxu0 0.0
      %559 = vmatprep.subr.mxu0 0.0
      %560 = vmatpush1.msra.mxu0 0.0
      %561 = vmatprep.subr.mxu0 0.0
      %562 = vmatpush1.msra.mxu0 0.0
      %563 = vmatprep.subr.mxu0 0.0
      %564 = vmatpush1.msra.mxu0 0.0
      %565 = vmatprep.subr.mxu0 0.0
      %566 = vmatpush1.msra.mxu0 0.0
      %567 = vmatprep.subr.mxu0 0.0
      %568 = vmatpush1.msra.mxu0 0.0
      %569 = vmatprep.subr.mxu0 0.0
      %570 = vmatpush1.msra.mxu0 0.0
      %571 = vmatprep.subr.mxu0 0.0
      %572 = vmatpush1.msra.mxu0 0.0
      %573 = vmatprep.subr.mxu0 0.0
      %574 = vmatpush1.msra.mxu0 0.0
      %575 = vmatprep.subr.mxu0 0.0
      %576 = vmatpush1.msra.mxu0 0.0
      %577 = vmatprep.subr.mxu0 0.0
      %578 = vmatpush1.msra.mxu0 0.0
      %579 = vmatprep.subr.mxu0 0.0
      %580 = vmatpush1.msra.mxu0 0.0
      %581 = vmatprep.subr.mxu0 0.0
      %582 = vmatpush1.msra.mxu0 0.0
      %583 = vmatprep.subr.mxu0 0.0
      %584 = vmatpush1.msra.mxu0 0.0
      %585 = vmatprep.subr.mxu0 0.0
      %586 = vmatpush1.msra.mxu0 0.0
      %587 = vmatprep.subr.mxu0 0.0
      %588 = vmatpush1.msra.mxu0 0.0
      %589 = vmatprep.subr.mxu0 0.0
      %590 = vmatpush1.msra.mxu0 0.0
      %591 = vmatprep.subr.mxu0 0.0
      %592 = vmatpush1.msra.mxu0 0.0
      %593 = vmatprep.subr.mxu0 0.0
      %594 = vmatpush1.msra.mxu0 0.0
      %595 = vmatprep.subr.mxu0 0.0
      %596 = vmatpush1.msra.mxu0 0.0
      %597 = vmatprep.subr.mxu0 0.0
      %598 = vmatpush1.msra.mxu0 0.0
      %599 = vmatprep.subr.mxu0 0.0
      %600 = vmatpush1.msra.mxu0 0.0
      %601 = vmatprep.subr.mxu0 0.0
      %602 = vmatpush1.msra.mxu0 0.0
      %603 = vmatprep.subr.mxu0 0.0
      %604 = vmatpush1.msra.mxu0 0.0
      %605 = vmatprep.mubr.f32.mxu0 0.0
      %606 = vmatmul.mubr.f32.gmra.mrb[0].mxu0 %v539
      %v607 = vpop.f32.mrb[0].mxu0
      %v608 = vadd.f32 0.0, %v607
      %v609 = vpop.f32.mrb[0].mxu0
      %610 = vdwg.mxu0
      %v611 = vadd.f32 %v535, %v608
      %v612 = vxor.u32 %v611, 2147483648
      %v613 = vmul.f32 %v612, 1.442695
      %v614 = vpow.pop %v613
      %v615 = vadd.f32 %v614, 1.0
      %v616 = vrcp.pop %v615
      %v617 = vmul.f32 1.0, %v616
      %v618 = vtanh.pop %v611
      %v619 = vmul.f32 %v617, %v530
      %621 = vrot.lane.b32.xlu0 %v618, 32
      %v622 = vpop.permute.xlu0 %621
      %v624 = vmul.f32 %v617, %v622
      %626 = vrot.lane.b32.xlu0 %v624, 32
      %v627 = vpop.permute.xlu0 %626
      %v629 = vadd.f32 %v619, %v627
      %v630 = vtanh.pop %v629
      %632 = vrot.lane.b32.xlu0 %v630, 32
      %v633 = vpop.permute.xlu0 %632
      %v635 = vmul.f32 %v617, %v633
      %v636 = vstv %s532
      %vm637 = vcmp.lt.s32.totalorder %v636, %v418
      %v638 = vsel %vm637, 1, 0
      %639 = vset.pattern.permute.xlu0 0
      %640 = vperm.xlu0 %639, %v638
      %v641 = vpop.permute.xlu0 %640
      %vm642 = vcmp.eq.s32.totalorder %v641, 1
      %v643 = vsel %vm642, %v635, %v529
      %v644 = vsel %vm642, %v629, %v530
      %v645 = vsel %vm642, %v635, 0.0
      %v646 = vadd.f32 %v531, %v645
      %s647 = scalar_select %p419, 2, 5
      %s648 = smul.u32 %s647, 8
      %s649 = scalar_lea.vmem [#allocation2], %s648
      %v650 = vld [vmem:[%s649] sm:$0xff]
      %652 = vrot.lane.b32.xlu0 %v643, 64
      %v653 = vpop.permute.xlu0 %652
      %v654 = vsel %vm276, %v653, 0
      %656 = vmatprep.subr.mxu0 0.0
      %657 = vmatpush1.msra.mxu0 %v414
      %658 = vmatprep.subr.mxu0 0.0
      %659 = vmatpush1.msra.mxu0 %v415
      %660 = vmatprep.subr.mxu0 0.0
      %661 = vmatpush1.msra.mxu0 %v416
      %662 = vmatprep.subr.mxu0 0.0
      %663 = vmatpush1.msra.mxu0 %v417
      %664 = vmatprep.subr.mxu0 0.0
      %665 = vmatpush1.msra.mxu0 0.0
      %666 = vmatprep.subr.mxu0 0.0
      %667 = vmatpush1.msra.mxu0 0.0
      %668 = vmatprep.subr.mxu0 0.0
      %669 = vmatpush1.msra.mxu0 0.0
      %670 = vmatprep.subr.mxu0 0.0
      %671 = vmatpush1.msra.mxu0 0.0
      %672 = vmatprep.subr.mxu0 0.0
      %673 = vmatpush1.msra.mxu0 0.0
      %674 = vmatprep.subr.mxu0 0.0
      %675 = vmatpush1.msra.mxu0 0.0
      %676 = vmatprep.subr.mxu0 0.0
      %677 = vmatpush1.msra.mxu0 0.0
      %678 = vmatprep.subr.mxu0 0.0
      %679 = vmatpush1.msra.mxu0 0.0
      %680 = vmatprep.subr.mxu0 0.0
      %681 = vmatpush1.msra.mxu0 0.0
      %682 = vmatprep.subr.mxu0 0.0
      %683 = vmatpush1.msra.mxu0 0.0
      %684 = vmatprep.subr.mxu0 0.0
      %685 = vmatpush1.msra.mxu0 0.0
      %686 = vmatprep.subr.mxu0 0.0
      %687 = vmatpush1.msra.mxu0 0.0
      %688 = vmatprep.subr.mxu0 0.0
      %689 = vmatpush1.msra.mxu0 0.0
      %690 = vmatprep.subr.mxu0 0.0
      %691 = vmatpush1.msra.mxu0 0.0
      %692 = vmatprep.subr.mxu0 0.0
      %693 = vmatpush1.msra.mxu0 0.0
      %694 = vmatprep.subr.mxu0 0.0
      %695 = vmatpush1.msra.mxu0 0.0
      %696 = vmatprep.subr.mxu0 0.0
      %697 = vmatpush1.msra.mxu0 0.0
      %698 = vmatprep.subr.mxu0 0.0
      %699 = vmatpush1.msra.mxu0 0.0
      %700 = vmatprep.subr.mxu0 0.0
      %701 = vmatpush1.msra.mxu0 0.0
      %702 = vmatprep.subr.mxu0 0.0
      %703 = vmatpush1.msra.mxu0 0.0
      %704 = vmatprep.subr.mxu0 0.0
      %705 = vmatpush1.msra.mxu0 0.0
      %706 = vmatprep.subr.mxu0 0.0
      %707 = vmatpush1.msra.mxu0 0.0
      %708 = vmatprep.subr.mxu0 0.0
      %709 = vmatpush1.msra.mxu0 0.0
      %710 = vmatprep.subr.mxu0 0.0
      %711 = vmatpush1.msra.mxu0 0.0
      %712 = vmatprep.subr.mxu0 0.0
      %713 = vmatpush1.msra.mxu0 0.0
      %714 = vmatprep.subr.mxu0 0.0
      %715 = vmatpush1.msra.mxu0 0.0
      %716 = vmatprep.subr.mxu0 0.0
      %717 = vmatpush1.msra.mxu0 0.0
      %718 = vmatprep.subr.mxu0 0.0
      %719 = vmatpush1.msra.mxu0 0.0
      %720 = vmatprep.mubr.f32.mxu0 0.0
      %721 = vmatmul.mubr.f32.gmra.mrb[0].mxu0 %v654
      %v722 = vpop.f32.mrb[0].mxu0
      %v723 = vadd.f32 0.0, %v722
      %v724 = vpop.f32.mrb[0].mxu0
      %725 = vdwg.mxu0
      %v726 = vadd.f32 %v650, %v723
      %v727 = vxor.u32 %v726, 2147483648
      %v728 = vmul.f32 %v727, 1.442695
      %v729 = vpow.pop %v728
      %v730 = vadd.f32 %v729, 1.0
      %v731 = vrcp.pop %v730
      %v732 = vmul.f32 1.0, %v731
      %v733 = vtanh.pop %v726
      %v734 = vmul.f32 %v732, %v644
      %736 = vrot.lane.b32.xlu0 %v733, 32
      %v737 = vpop.permute.xlu0 %736
      %v739 = vmul.f32 %v732, %v737
      %741 = vrot.lane.b32.xlu0 %v739, 32
      %v742 = vpop.permute.xlu0 %741
      %v744 = vadd.f32 %v734, %v742
      %v745 = vtanh.pop %v744
      %747 = vrot.lane.b32.xlu0 %v745, 32
      %v748 = vpop.permute.xlu0 %747
      %v750 = vmul.f32 %v732, %v748
      %v751 = vstv %s647
      %vm752 = vcmp.lt.s32.totalorder %v751, %v418
      %v753 = vsel %vm752, 1, 0
      %754 = vset.pattern.permute.xlu0 0
      %755 = vperm.xlu0 %754, %v753
      %v756 = vpop.permute.xlu0 %755
      %vm757 = vcmp.eq.s32.totalorder %v756, 1
      %v758 = vsel %vm757, %v750, %v643
      %v759 = vsel %vm757, %v744, %v644
      %v760 = vsel %vm757, %v750, 0.0
      %v761 = vadd.f32 %v646, %v760
      %s762 = scalar_select %p419, 3, 4
      %s763 = smul.u32 %s762, 8
      %s764 = scalar_lea.vmem [#allocation2], %s763
      %v765 = vld [vmem:[%s764] sm:$0xff]
      %767 = vrot.lane.b32.xlu0 %v758, 64
      %v768 = vpop.permute.xlu0 %767
      %v769 = vsel %vm276, %v768, 0
      %771 = vmatprep.subr.mxu0 0.0
      %772 = vmatpush1.msra.mxu0 %v414
      %773 = vmatprep.subr.mxu0 0.0
      %774 = vmatpush1.msra.mxu0 %v415
      %775 = vmatprep.subr.mxu0 0.0
      %776 = vmatpush1.msra.mxu0 %v416
      %777 = vmatprep.subr.mxu0 0.0
      %778 = vmatpush1.msra.mxu0 %v417
      %779 = vmatprep.subr.mxu0 0.0
      %780 = vmatpush1.msra.mxu0 0.0
      %781 = vmatprep.subr.mxu0 0.0
      %782 = vmatpush1.msra.mxu0 0.0
      %783 = vmatprep.subr.mxu0 0.0
      %784 = vmatpush1.msra.mxu0 0.0
      %785 = vmatprep.subr.mxu0 0.0
      %786 = vmatpush1.msra.mxu0 0.0
      %787 = vmatprep.subr.mxu0 0.0
      %788 = vmatpush1.msra.mxu0 0.0
      %789 = vmatprep.subr.mxu0 0.0
      %790 = vmatpush1.msra.mxu0 0.0
      %791 = vmatprep.subr.mxu0 0.0
      %792 = vmatpush1.msra.mxu0 0.0
      %793 = vmatprep.subr.mxu0 0.0
      %794 = vmatpush1.msra.mxu0 0.0
      %795 = vmatprep.subr.mxu0 0.0
      %796 = vmatpush1.msra.mxu0 0.0
      %797 = vmatprep.subr.mxu0 0.0
      %798 = vmatpush1.msra.mxu0 0.0
      %799 = vmatprep.subr.mxu0 0.0
      %800 = vmatpush1.msra.mxu0 0.0
      %801 = vmatprep.subr.mxu0 0.0
      %802 = vmatpush1.msra.mxu0 0.0
      %803 = vmatprep.subr.mxu0 0.0
      %804 = vmatpush1.msra.mxu0 0.0
      %805 = vmatprep.subr.mxu0 0.0
      %806 = vmatpush1.msra.mxu0 0.0
      %807 = vmatprep.subr.mxu0 0.0
      %808 = vmatpush1.msra.mxu0 0.0
      %809 = vmatprep.subr.mxu0 0.0
      %810 = vmatpush1.msra.mxu0 0.0
      %811 = vmatprep.subr.mxu0 0.0
      %812 = vmatpush1.msra.mxu0 0.0
      %813 = vmatprep.subr.mxu0 0.0
      %814 = vmatpush1.msra.mxu0 0.0
      %815 = vmatprep.subr.mxu0 0.0
      %816 = vmatpush1.msra.mxu0 0.0
      %817 = vmatprep.subr.mxu0 0.0
      %818 = vmatpush1.msra.mxu0 0.0
      %819 = vmatprep.subr.mxu0 0.0
      %820 = vmatpush1.msra.mxu0 0.0
      %821 = vmatprep.subr.mxu0 0.0
      %822 = vmatpush1.msra.mxu0 0.0
      %823 = vmatprep.subr.mxu0 0.0
      %824 = vmatpush1.msra.mxu0 0.0
      %825 = vmatprep.subr.mxu0 0.0
      %826 = vmatpush1.msra.mxu0 0.0
      %827 = vmatprep.subr.mxu0 0.0
      %828 = vmatpush1.msra.mxu0 0.0
      %829 = vmatprep.subr.mxu0 0.0
      %830 = vmatpush1.msra.mxu0 0.0
      %831 = vmatprep.subr.mxu0 0.0
      %832 = vmatpush1.msra.mxu0 0.0
      %833 = vmatprep.subr.mxu0 0.0
      %834 = vmatpush1.msra.mxu0 0.0
      %835 = vmatprep.mubr.f32.mxu0 0.0
      %836 = vmatmul.mubr.f32.gmra.mrb[0].mxu0 %v769
      %v837 = vpop.f32.mrb[0].mxu0
      %v838 = vadd.f32 0.0, %v837
      %v839 = vpop.f32.mrb[0].mxu0
      %840 = vdwg.mxu0
      %v841 = vadd.f32 %v765, %v838
      %v842 = vxor.u32 %v841, 2147483648
      %v843 = vmul.f32 %v842, 1.442695
      %v844 = vpow.pop %v843
      %v845 = vadd.f32 %v844, 1.0
      %v846 = vrcp.pop %v845
      %v847 = vmul.f32 1.0, %v846
      %v848 = vtanh.pop %v841
      %v849 = vmul.f32 %v847, %v759
      %851 = vrot.lane.b32.xlu0 %v848, 32
      %v852 = vpop.permute.xlu0 %851
      %v854 = vmul.f32 %v847, %v852
      %856 = vrot.lane.b32.xlu0 %v854, 32
      %v857 = vpop.permute.xlu0 %856
      %v859 = vadd.f32 %v849, %v857
      %v860 = vtanh.pop %v859
      %862 = vrot.lane.b32.xlu0 %v860, 32
      %v863 = vpop.permute.xlu0 %862
      %v865 = vmul.f32 %v847, %v863
      %v866 = vstv %s762
      %vm867 = vcmp.lt.s32.totalorder %v866, %v418
      %v868 = vsel %vm867, 1, 0
      %869 = vset.pattern.permute.xlu0 0
      %870 = vperm.xlu0 %869, %v868
      %v871 = vpop.permute.xlu0 %870
      %vm872 = vcmp.eq.s32.totalorder %v871, 1
      %v873 = vsel %vm872, %v865, %v758
      %v874 = vsel %vm872, %v859, %v759
      %v875 = vsel %vm872, %v865, 0.0
      %v876 = vadd.f32 %v761, %v875
      %s877 = scalar_select %p419, 4, 3
      %s878 = smul.u32 %s877, 8
      %s879 = scalar_lea.vmem [#allocation2], %s878
      %v880 = vld [vmem:[%s879] sm:$0xff]
      %882 = vrot.lane.b32.xlu0 %v873, 64
      %v883 = vpop.permute.xlu0 %882
      %v884 = vsel %vm276, %v883, 0
      %886 = vmatprep.subr.mxu0 0.0
      %887 = vmatpush1.msra.mxu0 %v414
      %888 = vmatprep.subr.mxu0 0.0
      %889 = vmatpush1.msra.mxu0 %v415
      %890 = vmatprep.subr.mxu0 0.0
      %891 = vmatpush1.msra.mxu0 %v416
      %892 = vmatprep.subr.mxu0 0.0
      %893 = vmatpush1.msra.mxu0 %v417
      %894 = vmatprep.subr.mxu0 0.0
      %895 = vmatpush1.msra.mxu0 0.0
      %896 = vmatprep.subr.mxu0 0.0
      %897 = vmatpush1.msra.mxu0 0.0
      %898 = vmatprep.subr.mxu0 0.0
      %899 = vmatpush1.msra.mxu0 0.0
      %900 = vmatprep.subr.mxu0 0.0
      %901 = vmatpush1.msra.mxu0 0.0
      %902 = vmatprep.subr.mxu0 0.0
      %903 = vmatpush1.msra.mxu0 0.0
      %904 = vmatprep.subr.mxu0 0.0
      %905 = vmatpush1.msra.mxu0 0.0
      %906 = vmatprep.subr.mxu0 0.0
      %907 = vmatpush1.msra.mxu0 0.0
      %908 = vmatprep.subr.mxu0 0.0
      %909 = vmatpush1.msra.mxu0 0.0
      %910 = vmatprep.subr.mxu0 0.0
      %911 = vmatpush1.msra.mxu0 0.0
      %912 = vmatprep.subr.mxu0 0.0
      %913 = vmatpush1.msra.mxu0 0.0
      %914 = vmatprep.subr.mxu0 0.0
      %915 = vmatpush1.msra.mxu0 0.0
      %916 = vmatprep.subr.mxu0 0.0
      %917 = vmatpush1.msra.mxu0 0.0
      %918 = vmatprep.subr.mxu0 0.0
      %919 = vmatpush1.msra.mxu0 0.0
      %920 = vmatprep.subr.mxu0 0.0
      %921 = vmatpush1.msra.mxu0 0.0
      %922 = vmatprep.subr.mxu0 0.0
      %923 = vmatpush1.msra.mxu0 0.0
      %924 = vmatprep.subr.mxu0 0.0
      %925 = vmatpush1.msra.mxu0 0.0
      %926 = vmatprep.subr.mxu0 0.0
      %927 = vmatpush1.msra.mxu0 0.0
      %928 = vmatprep.subr.mxu0 0.0
      %929 = vmatpush1.msra.mxu0 0.0
      %930 = vmatprep.subr.mxu0 0.0
      %931 = vmatpush1.msra.mxu0 0.0
      %932 = vmatprep.subr.mxu0 0.0
      %933 = vmatpush1.msra.mxu0 0.0
      %934 = vmatprep.subr.mxu0 0.0
      %935 = vmatpush1.msra.mxu0 0.0
      %936 = vmatprep.subr.mxu0 0.0
      %937 = vmatpush1.msra.mxu0 0.0
      %938 = vmatprep.subr.mxu0 0.0
      %939 = vmatpush1.msra.mxu0 0.0
      %940 = vmatprep.subr.mxu0 0.0
      %941 = vmatpush1.msra.mxu0 0.0
      %942 = vmatprep.subr.mxu0 0.0
      %943 = vmatpush1.msra.mxu0 0.0
      %944 = vmatprep.subr.mxu0 0.0
      %945 = vmatpush1.msra.mxu0 0.0
      %946 = vmatprep.subr.mxu0 0.0
      %947 = vmatpush1.msra.mxu0 0.0
      %948 = vmatprep.subr.mxu0 0.0
      %949 = vmatpush1.msra.mxu0 0.0
      %950 = vmatprep.mubr.f32.mxu0 0.0
      %951 = vmatmul.mubr.f32.gmra.mrb[0].mxu0 %v884
      %v952 = vpop.f32.mrb[0].mxu0
      %v953 = vadd.f32 0.0, %v952
      %v954 = vpop.f32.mrb[0].mxu0
      %955 = vdwg.mxu0
      %v956 = vadd.f32 %v880, %v953
      %v957 = vxor.u32 %v956, 2147483648
      %v958 = vmul.f32 %v957, 1.442695
      %v959 = vpow.pop %v958
      %v960 = vadd.f32 %v959, 1.0
      %v961 = vrcp.pop %v960
      %v962 = vmul.f32 1.0, %v961
      %v963 = vtanh.pop %v956
      %v964 = vmul.f32 %v962, %v874
      %966 = vrot.lane.b32.xlu0 %v963, 32
      %v967 = vpop.permute.xlu0 %966
      %v969 = vmul.f32 %v962, %v967
      %971 = vrot.lane.b32.xlu0 %v969, 32
      %v972 = vpop.permute.xlu0 %971
      %v974 = vadd.f32 %v964, %v972
      %v975 = vtanh.pop %v974
      %977 = vrot.lane.b32.xlu0 %v975, 32
      %v978 = vpop.permute.xlu0 %977
      %v980 = vmul.f32 %v962, %v978
      %v981 = vstv %s877
      %vm982 = vcmp.lt.s32.totalorder %v981, %v418
      %v983 = vsel %vm982, 1, 0
      %984 = vset.pattern.permute.xlu0 0
      %985 = vperm.xlu0 %984, %v983
      %v986 = vpop.permute.xlu0 %985
      %vm987 = vcmp.eq.s32.totalorder %v986, 1
      %v988 = vsel %vm987, %v980, %v873
      %v989 = vsel %vm987, %v974, %v874
      %v990 = vsel %vm987, %v980, 0.0
      %v991 = vadd.f32 %v876, %v990
      %s992 = scalar_select %p419, 5, 2
      %s993 = smul.u32 %s992, 8
      %s994 = scalar_lea.vmem [#allocation2], %s993
      %v995 = vld [vmem:[%s994] sm:$0xff]
      %997 = vrot.lane.b32.xlu0 %v988, 64
      %v998 = vpop.permute.xlu0 %997
      %v999 = vsel %vm276, %v998, 0
      %1001 = vmatprep.subr.mxu0 0.0
      %1002 = vmatpush1.msra.mxu0 %v414
      %1003 = vmatprep.subr.mxu0 0.0
      %1004 = vmatpush1.msra.mxu0 %v415
      %1005 = vmatprep.subr.mxu0 0.0
      %1006 = vmatpush1.msra.mxu0 %v416
      %1007 = vmatprep.subr.mxu0 0.0
      %1008 = vmatpush1.msra.mxu0 %v417
      %1009 = vmatprep.subr.mxu0 0.0
      %1010 = vmatpush1.msra.mxu0 0.0
      %1011 = vmatprep.subr.mxu0 0.0
      %1012 = vmatpush1.msra.mxu0 0.0
      %1013 = vmatprep.subr.mxu0 0.0
      %1014 = vmatpush1.msra.mxu0 0.0
      %1015 = vmatprep.subr.mxu0 0.0
      %1016 = vmatpush1.msra.mxu0 0.0
      %1017 = vmatprep.subr.mxu0 0.0
      %1018 = vmatpush1.msra.mxu0 0.0
      %1019 = vmatprep.subr.mxu0 0.0
      %1020 = vmatpush1.msra.mxu0 0.0
      %1021 = vmatprep.subr.mxu0 0.0
      %1022 = vmatpush1.msra.mxu0 0.0
      %1023 = vmatprep.subr.mxu0 0.0
      %1024 = vmatpush1.msra.mxu0 0.0
      %1025 = vmatprep.subr.mxu0 0.0
      %1026 = vmatpush1.msra.mxu0 0.0
      %1027 = vmatprep.subr.mxu0 0.0
      %1028 = vmatpush1.msra.mxu0 0.0
      %1029 = vmatprep.subr.mxu0 0.0
      %1030 = vmatpush1.msra.mxu0 0.0
      %1031 = vmatprep.subr.mxu0 0.0
      %1032 = vmatpush1.msra.mxu0 0.0
      %1033 = vmatprep.subr.mxu0 0.0
      %1034 = vmatpush1.msra.mxu0 0.0
      %1035 = vmatprep.subr.mxu0 0.0
      %1036 = vmatpush1.msra.mxu0 0.0
      %1037 = vmatprep.subr.mxu0 0.0
      %1038 = vmatpush1.msra.mxu0 0.0
      %1039 = vmatprep.subr.mxu0 0.0
      %1040 = vmatpush1.msra.mxu0 0.0
      %1041 = vmatprep.subr.mxu0 0.0
      %1042 = vmatpush1.msra.mxu0 0.0
      %1043 = vmatprep.subr.mxu0 0.0
      %1044 = vmatpush1.msra.mxu0 0.0
      %1045 = vmatprep.subr.mxu0 0.0
      %1046 = vmatpush1.msra.mxu0 0.0
      %1047 = vmatprep.subr.mxu0 0.0
      %1048 = vmatpush1.msra.mxu0 0.0
      %1049 = vmatprep.subr.mxu0 0.0
      %1050 = vmatpush1.msra.mxu0 0.0
      %1051 = vmatprep.subr.mxu0 0.0
      %1052 = vmatpush1.msra.mxu0 0.0
      %1053 = vmatprep.subr.mxu0 0.0
      %1054 = vmatpush1.msra.mxu0 0.0
      %1055 = vmatprep.subr.mxu0 0.0
      %1056 = vmatpush1.msra.mxu0 0.0
      %1057 = vmatprep.subr.mxu0 0.0
      %1058 = vmatpush1.msra.mxu0 0.0
      %1059 = vmatprep.subr.mxu0 0.0
      %1060 = vmatpush1.msra.mxu0 0.0
      %1061 = vmatprep.subr.mxu0 0.0
      %1062 = vmatpush1.msra.mxu0 0.0
      %1063 = vmatprep.subr.mxu0 0.0
      %1064 = vmatpush1.msra.mxu0 0.0
      %1065 = vmatprep.mubr.f32.mxu0 0.0
      %1066 = vmatmul.mubr.f32.gmra.mrb[0].mxu0 %v999
      %v1067 = vpop.f32.mrb[0].mxu0
      %v1068 = vadd.f32 0.0, %v1067
      %v1069 = vpop.f32.mrb[0].mxu0
      %1070 = vdwg.mxu0
      %v1071 = vadd.f32 %v995, %v1068
      %v1072 = vxor.u32 %v1071, 2147483648
      %v1073 = vmul.f32 %v1072, 1.442695
      %v1074 = vpow.pop %v1073
      %v1075 = vadd.f32 %v1074, 1.0
      %v1076 = vrcp.pop %v1075
      %v1077 = vmul.f32 1.0, %v1076
      %v1078 = vtanh.pop %v1071
      %v1079 = vmul.f32 %v1077, %v989
      %1081 = vrot.lane.b32.xlu0 %v1078, 32
      %v1082 = vpop.permute.xlu0 %1081
      %v1084 = vmul.f32 %v1077, %v1082
      %1086 = vrot.lane.b32.xlu0 %v1084, 32
      %v1087 = vpop.permute.xlu0 %1086
      %v1089 = vadd.f32 %v1079, %v1087
      %v1090 = vtanh.pop %v1089
      %1092 = vrot.lane.b32.xlu0 %v1090, 32
      %v1093 = vpop.permute.xlu0 %1092
      %v1095 = vmul.f32 %v1077, %v1093
      %v1096 = vstv %s992
      %vm1097 = vcmp.lt.s32.totalorder %v1096, %v418
      %v1098 = vsel %vm1097, 1, 0
      %1099 = vset.pattern.permute.xlu0 0
      %1100 = vperm.xlu0 %1099, %v1098
      %v1101 = vpop.permute.xlu0 %1100
      %vm1102 = vcmp.eq.s32.totalorder %v1101, 1
      %v1103 = vsel %vm1102, %v1095, %v988
      %v1104 = vsel %vm1102, %v1089, %v989
      %v1105 = vsel %vm1102, %v1095, 0.0
      %v1106 = vadd.f32 %v991, %v1105
      %s1107 = scalar_select %p419, 6, 1
      %s1108 = smul.u32 %s1107, 8
      %s1109 = scalar_lea.vmem [#allocation2], %s1108
      %v1110 = vld [vmem:[%s1109] sm:$0xff]
      %1112 = vrot.lane.b32.xlu0 %v1103, 64
      %v1113 = vpop.permute.xlu0 %1112
      %v1114 = vsel %vm276, %v1113, 0
      %1116 = vmatprep.subr.mxu0 0.0
      %1117 = vmatpush1.msra.mxu0 %v414
      %1118 = vmatprep.subr.mxu0 0.0
      %1119 = vmatpush1.msra.mxu0 %v415
      %1120 = vmatprep.subr.mxu0 0.0
      %1121 = vmatpush1.msra.mxu0 %v416
      %1122 = vmatprep.subr.mxu0 0.0
      %1123 = vmatpush1.msra.mxu0 %v417
      %1124 = vmatprep.subr.mxu0 0.0
      %1125 = vmatpush1.msra.mxu0 0.0
      %1126 = vmatprep.subr.mxu0 0.0
      %1127 = vmatpush1.msra.mxu0 0.0
      %1128 = vmatprep.subr.mxu0 0.0
      %1129 = vmatpush1.msra.mxu0 0.0
      %1130 = vmatprep.subr.mxu0 0.0
      %1131 = vmatpush1.msra.mxu0 0.0
      %1132 = vmatprep.subr.mxu0 0.0
      %1133 = vmatpush1.msra.mxu0 0.0
      %1134 = vmatprep.subr.mxu0 0.0
      %1135 = vmatpush1.msra.mxu0 0.0
      %1136 = vmatprep.subr.mxu0 0.0
      %1137 = vmatpush1.msra.mxu0 0.0
      %1138 = vmatprep.subr.mxu0 0.0
      %1139 = vmatpush1.msra.mxu0 0.0
      %1140 = vmatprep.subr.mxu0 0.0
      %1141 = vmatpush1.msra.mxu0 0.0
      %1142 = vmatprep.subr.mxu0 0.0
      %1143 = vmatpush1.msra.mxu0 0.0
      %1144 = vmatprep.subr.mxu0 0.0
      %1145 = vmatpush1.msra.mxu0 0.0
      %1146 = vmatprep.subr.mxu0 0.0
      %1147 = vmatpush1.msra.mxu0 0.0
      %1148 = vmatprep.subr.mxu0 0.0
      %1149 = vmatpush1.msra.mxu0 0.0
      %1150 = vmatprep.subr.mxu0 0.0
      %1151 = vmatpush1.msra.mxu0 0.0
      %1152 = vmatprep.subr.mxu0 0.0
      %1153 = vmatpush1.msra.mxu0 0.0
      %1154 = vmatprep.subr.mxu0 0.0
      %1155 = vmatpush1.msra.mxu0 0.0
      %1156 = vmatprep.subr.mxu0 0.0
      %1157 = vmatpush1.msra.mxu0 0.0
      %1158 = vmatprep.subr.mxu0 0.0
      %1159 = vmatpush1.msra.mxu0 0.0
      %1160 = vmatprep.subr.mxu0 0.0
      %1161 = vmatpush1.msra.mxu0 0.0
      %1162 = vmatprep.subr.mxu0 0.0
      %1163 = vmatpush1.msra.mxu0 0.0
      %1164 = vmatprep.subr.mxu0 0.0
      %1165 = vmatpush1.msra.mxu0 0.0
      %1166 = vmatprep.subr.mxu0 0.0
      %1167 = vmatpush1.msra.mxu0 0.0
      %1168 = vmatprep.subr.mxu0 0.0
      %1169 = vmatpush1.msra.mxu0 0.0
      %1170 = vmatprep.subr.mxu0 0.0
      %1171 = vmatpush1.msra.mxu0 0.0
      %1172 = vmatprep.subr.mxu0 0.0
      %1173 = vmatpush1.msra.mxu0 0.0
      %1174 = vmatprep.subr.mxu0 0.0
      %1175 = vmatpush1.msra.mxu0 0.0
      %1176 = vmatprep.subr.mxu0 0.0
      %1177 = vmatpush1.msra.mxu0 0.0
      %1178 = vmatprep.subr.mxu0 0.0
      %1179 = vmatpush1.msra.mxu0 0.0
      %1180 = vmatprep.mubr.f32.mxu0 0.0
      %1181 = vmatmul.mubr.f32.gmra.mrb[0].mxu0 %v1114
      %v1182 = vpop.f32.mrb[0].mxu0
      %v1183 = vadd.f32 0.0, %v1182
      %v1184 = vpop.f32.mrb[0].mxu0
      %1185 = vdwg.mxu0
      %v1186 = vadd.f32 %v1110, %v1183
      %v1187 = vxor.u32 %v1186, 2147483648
      %v1188 = vmul.f32 %v1187, 1.442695
      %v1189 = vpow.pop %v1188
      %v1190 = vadd.f32 %v1189, 1.0
      %v1191 = vrcp.pop %v1190
      %v1192 = vmul.f32 1.0, %v1191
      %v1193 = vtanh.pop %v1186
      %v1194 = vmul.f32 %v1192, %v1104
      %1196 = vrot.lane.b32.xlu0 %v1193, 32
      %v1197 = vpop.permute.xlu0 %1196
      %v1199 = vmul.f32 %v1192, %v1197
      %1201 = vrot.lane.b32.xlu0 %v1199, 32
      %v1202 = vpop.permute.xlu0 %1201
      %v1204 = vadd.f32 %v1194, %v1202
      %v1205 = vtanh.pop %v1204
      %1207 = vrot.lane.b32.xlu0 %v1205, 32
      %v1208 = vpop.permute.xlu0 %1207
      %v1210 = vmul.f32 %v1192, %v1208
      %v1211 = vstv %s1107
      %vm1212 = vcmp.lt.s32.totalorder %v1211, %v418
      %v1213 = vsel %vm1212, 1, 0
      %1214 = vset.pattern.permute.xlu0 0
      %1215 = vperm.xlu0 %1214, %v1213
      %v1216 = vpop.permute.xlu0 %1215
      %vm1217 = vcmp.eq.s32.totalorder %v1216, 1
      %v1218 = vsel %vm1217, %v1210, %v1103
      %v1219 = vsel %vm1217, %v1204, %v1104
      %v1220 = vsel %vm1217, %v1210, 0.0
      %v1221 = vadd.f32 %v1106, %v1220
      %s1222 = scalar_select %p419, 7, 0
      %s1223 = smul.u32 %s1222, 8
      %s1224 = scalar_lea.vmem [#allocation2], %s1223
      %v1225 = vld [vmem:[%s1224] sm:$0xff]
      %1227 = vrot.lane.b32.xlu0 %v1218, 64
      %v1228 = vpop.permute.xlu0 %1227
      %v1229 = vsel %vm276, %v1228, 0
      %1231 = vmatprep.subr.mxu0 0.0
      %1232 = vmatpush1.msra.mxu0 %v414
      %1233 = vmatprep.subr.mxu0 0.0
      %1234 = vmatpush1.msra.mxu0 %v415
      %1235 = vmatprep.subr.mxu0 0.0
      %1236 = vmatpush1.msra.mxu0 %v416
      %1237 = vmatprep.subr.mxu0 0.0
      %1238 = vmatpush1.msra.mxu0 %v417
      %1239 = vmatprep.subr.mxu0 0.0
      %1240 = vmatpush1.msra.mxu0 0.0
      %1241 = vmatprep.subr.mxu0 0.0
      %1242 = vmatpush1.msra.mxu0 0.0
      %1243 = vmatprep.subr.mxu0 0.0
      %1244 = vmatpush1.msra.mxu0 0.0
      %1245 = vmatprep.subr.mxu0 0.0
      %1246 = vmatpush1.msra.mxu0 0.0
      %1247 = vmatprep.subr.mxu0 0.0
      %1248 = vmatpush1.msra.mxu0 0.0
      %1249 = vmatprep.subr.mxu0 0.0
      %1250 = vmatpush1.msra.mxu0 0.0
      %1251 = vmatprep.subr.mxu0 0.0
      %1252 = vmatpush1.msra.mxu0 0.0
      %1253 = vmatprep.subr.mxu0 0.0
      %1254 = vmatpush1.msra.mxu0 0.0
      %1255 = vmatprep.subr.mxu0 0.0
      %1256 = vmatpush1.msra.mxu0 0.0
      %1257 = vmatprep.subr.mxu0 0.0
      %1258 = vmatpush1.msra.mxu0 0.0
      %1259 = vmatprep.subr.mxu0 0.0
      %1260 = vmatpush1.msra.mxu0 0.0
      %1261 = vmatprep.subr.mxu0 0.0
      %1262 = vmatpush1.msra.mxu0 0.0
      %1263 = vmatprep.subr.mxu0 0.0
      %1264 = vmatpush1.msra.mxu0 0.0
      %1265 = vmatprep.subr.mxu0 0.0
      %1266 = vmatpush1.msra.mxu0 0.0
      %1267 = vmatprep.subr.mxu0 0.0
      %1268 = vmatpush1.msra.mxu0 0.0
      %1269 = vmatprep.subr.mxu0 0.0
      %1270 = vmatpush1.msra.mxu0 0.0
      %1271 = vmatprep.subr.mxu0 0.0
      %1272 = vmatpush1.msra.mxu0 0.0
      %1273 = vmatprep.subr.mxu0 0.0
      %1274 = vmatpush1.msra.mxu0 0.0
      %1275 = vmatprep.subr.mxu0 0.0
      %1276 = vmatpush1.msra.mxu0 0.0
      %1277 = vmatprep.subr.mxu0 0.0
      %1278 = vmatpush1.msra.mxu0 0.0
      %1279 = vmatprep.subr.mxu0 0.0
      %1280 = vmatpush1.msra.mxu0 0.0
      %1281 = vmatprep.subr.mxu0 0.0
      %1282 = vmatpush1.msra.mxu0 0.0
      %1283 = vmatprep.subr.mxu0 0.0
      %1284 = vmatpush1.msra.mxu0 0.0
      %1285 = vmatprep.subr.mxu0 0.0
      %1286 = vmatpush1.msra.mxu0 0.0
      %1287 = vmatprep.subr.mxu0 0.0
      %1288 = vmatpush1.msra.mxu0 0.0
      %1289 = vmatprep.subr.mxu0 0.0
      %1290 = vmatpush1.msra.mxu0 0.0
      %1291 = vmatprep.subr.mxu0 0.0
      %1292 = vmatpush1.msra.mxu0 0.0
      %1293 = vmatprep.subr.mxu0 0.0
      %1294 = vmatpush1.msra.mxu0 0.0
      %1295 = vmatprep.mubr.f32.mxu0 0.0
      %1296 = vmatmul.mubr.f32.gmra.mrb[0].mxu0 %v1229
      %v1297 = vpop.f32.mrb[0].mxu0
      %v1298 = vadd.f32 0.0, %v1297
      %v1299 = vpop.f32.mrb[0].mxu0
      %1300 = vdwg.mxu0
      %v1301 = vadd.f32 %v1225, %v1298
      %v1302 = vxor.u32 %v1301, 2147483648
      %v1303 = vmul.f32 %v1302, 1.442695
      %v1304 = vpow.pop %v1303
      %v1305 = vadd.f32 %v1304, 1.0
      %v1306 = vrcp.pop %v1305
      %v1307 = vmul.f32 1.0, %v1306
      %v1308 = vtanh.pop %v1301
      %v1309 = vmul.f32 %v1307, %v1219
      %1311 = vrot.lane.b32.xlu0 %v1308, 32
      %v1312 = vpop.permute.xlu0 %1311
      %v1314 = vmul.f32 %v1307, %v1312
      %1316 = vrot.lane.b32.xlu0 %v1314, 32
      %v1317 = vpop.permute.xlu0 %1316
      %v1319 = vadd.f32 %v1309, %v1317
      %v1320 = vtanh.pop %v1319
      %1322 = vrot.lane.b32.xlu0 %v1320, 32
      %v1323 = vpop.permute.xlu0 %1322
      %v1325 = vmul.f32 %v1307, %v1323
      %v1326 = vstv %s1222
      %vm1327 = vcmp.lt.s32.totalorder %v1326, %v418
      %v1328 = vsel %vm1327, 1, 0
      %1329 = vset.pattern.permute.xlu0 0
      %1330 = vperm.xlu0 %1329, %v1328
      %v1331 = vpop.permute.xlu0 %1330
      %vm1332 = vcmp.eq.s32.totalorder %v1331, 1
      %v1333 = vsel %vm1332, %v1325, 0.0
      %v1334 = vadd.f32 %v1221, %v1333
      %1336 = vrot.lane.b32.xlu0 %v1334, 64
      %v1337 = vpop.permute.xlu0 %1336
      %1339 = vst.msk [vmem:[%s256] sm:$0xff] %vm276, %v1337
      %p1340 = scmp.lt.s32.totalorder %s16, 1
      %s1341 = scalar_select %p1340, %s16, 1
      %s1342 = smul.addr %s1341, 8
      %s1343 = scalar_lea.vmem %s5, %s1342
      // Predicated region
      $region41: #{article_encoder_forward.1} parent=39 // pred_check
        %p1344 = pneg %p154
      $region42: #{article_encoder_forward.1} parent=39 // pred_check_branch
        %1346 = sbr.rel (%p1344) target = $region44
      $region43: #{article_encoder_forward.1} parent=39 // pred_region
        _
      $region44: #{article_encoder_forward.1} parent=39 // pred_fallthru
        _
    $region40: #{article_encoder_forward.1} parent=5 // pred_fallthru
      _
    %p1347 = scmp.le.s32.totalorder 2, %s11
    // Predicated region
    $region45: #{article_encoder_forward.1} parent=5 // pred_check
      %p1348 = pneg %p1347
    $region46: #{article_encoder_forward.1} parent=5 // pred_check_branch
      %1350 = sbr.rel (%p1348) target = $region48
    $region47: #{article_encoder_forward.1} parent=5 // pred_region
      %s1351 = ssub.s32 %s11, 2
      // Predicated region
      $region49: #{article_encoder_forward.1} parent=47 // pred_check
        %p1352 = pneg %p160
      $region50: #{article_encoder_forward.1} parent=47 // pred_check_branch
        %1354 = sbr.rel (%p1352) target = $region52
      $region51: #{article_encoder_forward.1} parent=47 // pred_region
        %p1355 = scmp.lt.s32.totalorder %s17, 1
        %s1356 = scalar_select %p1355, %s17, 1
        %s1357 = smul.addr %s1356, 8
        %s1358 = scalar_lea.vmem %s5, %s1357
      $region52: #{article_encoder_forward.1} parent=47 // pred_fallthru
        _
    $region48: #{article_encoder_forward.1} parent=5 // pred_fallthru
      _
  $region6: #{article_encoder_forward.1} parent=0 // loop_footer
    %s15 = sadd.s32 1, %s11
  $region7: #{article_encoder_forward.1} parent=0 // loop_footer_branch
    %10 = sbr.rel target = $region3
  $region8: #{article_encoder_forward.1} parent=0 // loop_exit
    _

</llo_original>
